<compile_context>
chip_gen: v5e
topology: v5e:2x2
jax: 0.10.0
libtpu: 0.0.40
codegen_flags: <defaults>
</compile_context>

<pallas_src>
import functools

import jax
import jax.numpy as jnp
from jax import lax
from jax.experimental import pallas as pl
from jax.experimental.pallas import tpu as pltpu


_MASK = 1e30          # same "minus infinity" constant the PyTorch module uses
_TILE_M = 128         # row tile of the similarity matrix (sublane-aligned)
_TILE_N = 128         # col tile of the similarity matrix (lane-aligned)


def _round_up(x: int, m: int) -> int:
    return (x + m - 1) // m * m


def _contrastive_kernel(xr_ref, xc_ref, rr_ref, rc_ref, out_ref,
                        pos_acc, neg_acc, total_acc, *, tau: float, num_bags: int):
    # xr_ref: (TM, H)  row block of bag_repre        (VMEM)
    # xc_ref: (TN, H)  col block of bag_repre        (VMEM)
    # rr_ref: (TM, 1)  relations for the row block   (VMEM, int32)
    # rc_ref: (1, TN)  relations for the col block   (VMEM, int32)
    # out_ref:(8, 128) lane-dense output tile; scalar loss broadcast into it
    # pos_acc/neg_acc: (TM, 1) f32 running row maxima (VMEM scratch)
    # total_acc: (1, 1) f32 running total            (SMEM scratch)
    i = pl.program_id(0)
    j = pl.program_id(1)
    ni = pl.num_programs(0)
    nj = pl.num_programs(1)

    tm = xr_ref.shape[0]
    tn = xc_ref.shape[0]

    @pl.when(jnp.logical_and(i == 0, j == 0))
    def _init_total():
        total_acc[0, 0] = jnp.float32(0.0)

    @pl.when(j == 0)
    def _init_row_maxima():
        pos_acc[...] = jnp.full(pos_acc.shape, -jnp.inf, dtype=jnp.float32)
        neg_acc[...] = jnp.full(neg_acc.shape, -jnp.inf, dtype=jnp.float32)

    # --- L2-normalize both blocks in f32 (cast per tile; keeps HBM traffic in
    #     the input dtype if upstream feeds bf16). Padded zero rows -> h = 0.
    xr = xr_ref[...].astype(jnp.float32)                       # (TM, H)
    xc = xc_ref[...].astype(jnp.float32)                       # (TN, H)
    nr = jnp.sum(xr * xr, axis=-1, keepdims=True)              # (TM, 1)
    nc = jnp.sum(xc * xc, axis=-1, keepdims=True)              # (TN, 1)
    hr = xr * jnp.where(nr > 0.0, 1.0 / jnp.sqrt(nr), 0.0)
    hc = xc * jnp.where(nc > 0.0, 1.0 / jnp.sqrt(nc), 0.0)

    # --- similarity block on the MXU: hr @ hc^T without materializing hc^T
    sim = lax.dot_general(hr, hc, (((1,), (1,)), ((), ())),
                          preferred_element_type=jnp.float32)  # (TM, TN)

    # --- same-relation mask for this block
    same = (rr_ref[...] == rc_ref[...])                        # (TM,1)==(1,TN)->(TM,TN)
    same_f = same.astype(jnp.float32)

    tau_f = jnp.float32(tau)
    pos_cand = jnp.square(jnp.maximum(tau_f - sim, 0.0)) - (1.0 - same_f) * _MASK
    neg_cand = jnp.square(jnp.maximum(sim, 0.0)) - same_f * _MASK

    # --- mask out padded columns (global column index >= num_bags)
    col_valid = (lax.broadcasted_iota(jnp.int32, (tm, tn), 1) + j * tn) < num_bags
    pos_cand = jnp.where(col_valid, pos_cand, -jnp.inf)
    neg_cand = jnp.where(col_valid, neg_cand, -jnp.inf)

    # --- running per-row maxima across column tiles
    pos_acc[...] = jnp.maximum(pos_acc[...], jnp.max(pos_cand, axis=1, keepdims=True))
    neg_acc[...] = jnp.maximum(neg_acc[...], jnp.max(neg_cand, axis=1, keepdims=True))

    # --- after the last column tile: fold this row tile into the scalar total
    @pl.when(j == nj - 1)
    def _accumulate_rows():
        row_valid = (lax.broadcasted_iota(jnp.int32, (tm, 1), 0) + i * tm) < num_bags
        contrib = jnp.where(row_valid, pos_acc[...] + neg_acc[...], 0.0)
        total_acc[0, 0] = total_acc[0, 0] + jnp.sum(contrib)

    # --- very last grid point: publish the scalar into the lane-dense out tile
    @pl.when(jnp.logical_and(i == ni - 1, j == nj - 1))
    def _finalize():
        out_ref[...] = jnp.full(out_ref.shape, total_acc[0, 0], dtype=jnp.float32)


def contrastive_loss(bag_repre: jax.Array, rels: jax.Array, tau: float) -> jax.Array:
    """Pallas TPU implementation of ConstrativeLoss.forward. Returns f32 scalar."""
    b, h = bag_repre.shape
    assert rels.shape == (b,)

    tile_m, tile_n = _TILE_M, _TILE_N
    bp = _round_up(b, max(tile_m, tile_n))

    x = jnp.asarray(bag_repre)
    r = jnp.asarray(rels).astype(jnp.int32)
    if bp != b:
        x = jnp.pad(x, ((0, bp - b), (0, 0)))            # padded rows are all-zero
        r = jnp.pad(r, (0, bp - b), constant_values=-1)
    rels_row = r.reshape(bp, 1)
    rels_col = r.reshape(1, bp)

    grid = (bp // tile_m, bp // tile_n)
    kernel = functools.partial(_contrastive_kernel, tau=float(tau), num_bags=b)

    # TODO(synk): on v7x, split the row-tile axis across the 2 TensorCores
    # (per-core partial sums combined in the wrapper) instead of a fully
    # "arbitrary" sequential reduction grid.
    out = pl.pallas_call(
        kernel,
        out_shape=jax.ShapeDtypeStruct((8, 128), jnp.float32),
        grid_spec=pltpu.PrefetchScalarGridSpec(
            num_scalar_prefetch=0,
            grid=grid,
            in_specs=[
                pl.BlockSpec((tile_m, h), lambda i, j: (i, 0)),   # row block of x
                pl.BlockSpec((tile_n, h), lambda i, j: (j, 0)),   # col block of x
                pl.BlockSpec((tile_m, 1), lambda i, j: (i, 0)),   # rels (rows)
                pl.BlockSpec((1, tile_n), lambda i, j: (0, j)),   # rels (cols)
            ],
            out_specs=pl.BlockSpec((8, 128), lambda i, j: (0, 0)),  # resident tile
            scratch_shapes=[
                pltpu.VMEM((tile_m, 1), jnp.float32),   # pos running row max
                pltpu.VMEM((tile_m, 1), jnp.float32),   # neg running row max
                pltpu.SMEM((1, 1), jnp.float32),        # scalar total accumulator
            ],
        ),
        compiler_params=pltpu.CompilerParams(
            dimension_semantics=("arbitrary", "arbitrary"),
        ),
    )(x, x, rels_row, rels_col)
    return out[0, 0]


def _reference_loss(bag_repre: jax.Array, rels: jax.Array, tau: float) -> jax.Array:
    x = bag_repre.astype(jnp.float32)
    hn = x / jnp.linalg.norm(x, axis=1, keepdims=True)
    sim = hn @ hn.T
    idxs = (rels[:, None] == rels[None, :]).astype(jnp.float32)
    pos_dist = jnp.square(jnp.maximum(tau - sim, 0.0))
    pos = jnp.max(pos_dist - (1.0 - idxs) * _MASK, axis=1)
    neg_dist = jnp.square(jnp.maximum(sim, 0.0))
    neg = jnp.max(neg_dist - idxs * _MASK, axis=1)
    return jnp.sum(pos + neg)


if __name__ == "__main__":
    bags = 8          # number of bags
    hidden = 32       # hidden size
    tau = 0.5

    key = jax.random.PRNGKey(0)
    k1, k2 = jax.random.split(key)
    bag_repre = jax.random.normal(k1, (bags, hidden), dtype=jnp.float32)
    rels = jax.random.randint(k2, (bags,), 0, 3, dtype=jnp.int32)

    loss = jax.block_until_ready(contrastive_loss(bag_repre, rels, tau))
    ref = jax.block_until_ready(_reference_loss(bag_repre, rels, tau))

    assert jnp.allclose(loss, ref, rtol=1e-4, atol=1e-4), (loss, ref)
    print("KERNEL_OK")
</pallas_src>

<mosaic_0001>
module attributes {stable_mosaic.version = 11 : i64} {
  func.func @_contrastive_kernel(%arg0: i32, %arg1: i32, %arg2: memref<128x32xf32, #tpu.memory_space<vmem>>, %arg3: memref<128x32xf32, #tpu.memory_space<vmem>>, %arg4: memref<128x1xi32, #tpu.memory_space<vmem>>, %arg5: memref<1x128xi32, #tpu.memory_space<vmem>>, %arg6: memref<8x128xf32, #tpu.memory_space<vmem>>, %arg7: memref<128x1xf32, #tpu.memory_space<vmem>>, %arg8: memref<128x1xf32, #tpu.memory_space<vmem>>, %arg9: memref<1x1xf32, #tpu.memory_space<smem>>) attributes {dimension_semantics = [#tpu.dimension_semantics<arbitrary>, #tpu.dimension_semantics<arbitrary>], iteration_bounds = array<i64: 1, 1>, scalar_prefetch = 0 : i64, scratch_operands = 3 : i64, tpu.core_type = #tpu.core_type<tc>, window_params = [{transform_indices = @transform_0, window_bounds = array<i64: 128, 32>}, {transform_indices = @transform_1, window_bounds = array<i64: 128, 32>}, {transform_indices = @transform_2, window_bounds = array<i64: 128, 1>}, {transform_indices = @transform_3, window_bounds = array<i64: 1, 128>}, {pipeline_mode = #tpu.pipeline_mode<synchronous>, transform_indices = @transform_4, window_bounds = array<i64: 8, 128>}]} {
    %c0_i32 = arith.constant 0 : i32
    %0 = arith.cmpi eq, %arg0, %c0_i32 : i32
    %c0_i32_0 = arith.constant 0 : i32
    %1 = arith.cmpi eq, %arg1, %c0_i32_0 : i32
    %2 = arith.andi %0, %1 : i1
    %3 = arith.extui %2 : i1 to i32
    %c0_i32_1 = arith.constant 0 : i32
    %4 = arith.cmpi ne, %3, %c0_i32_1 : i32
    scf.if %4 {
      %cst_42 = arith.constant 0.000000e+00 : f32
      %c0_43 = arith.constant 0 : index
      %c0_44 = arith.constant 0 : index
      %86 = memref.load %arg9[%c0_43, %c0_44] : memref<1x1xf32, #tpu.memory_space<smem>>
      memref.store %cst_42, %arg9[%c0_43, %c0_44] : memref<1x1xf32, #tpu.memory_space<smem>>
    } else {
    }
    %c0_i32_2 = arith.constant 0 : i32
    %5 = arith.cmpi eq, %arg1, %c0_i32_2 : i32
    %6 = arith.extui %5 : i1 to i32
    %c0_i32_3 = arith.constant 0 : i32
    %7 = arith.cmpi ne, %6, %c0_i32_3 : i32
    scf.if %7 {
      %cst_42 = arith.constant 0xFF800000 : f32
      %86 = vector.broadcast %cst_42 : f32 to vector<128x1xf32>
      %c0_43 = arith.constant 0 : index
      %c0_44 = arith.constant 0 : index
      %87 = vector.load %arg7[%c0_43, %c0_44] : memref<128x1xf32, #tpu.memory_space<vmem>>, vector<128x1xf32>
      tpu.vector_store %arg7[%c0_43, %c0_44], %86 {strides = array<i32>} : memref<128x1xf32, #tpu.memory_space<vmem>>, vector<128x1xf32>,
      %cst_45 = arith.constant 0xFF800000 : f32
      %88 = vector.broadcast %cst_45 : f32 to vector<128x1xf32>
      %c0_46 = arith.constant 0 : index
      %c0_47 = arith.constant 0 : index
      %89 = vector.load %arg8[%c0_46, %c0_47] : memref<128x1xf32, #tpu.memory_space<vmem>>, vector<128x1xf32>
      tpu.vector_store %arg8[%c0_46, %c0_47], %88 {strides = array<i32>} : memref<128x1xf32, #tpu.memory_space<vmem>>, vector<128x1xf32>,
    } else {
    }
    %c0 = arith.constant 0 : index
    %c0_4 = arith.constant 0 : index
    %8 = vector.load %arg2[%c0, %c0_4] : memref<128x32xf32, #tpu.memory_space<vmem>>, vector<128x32xf32>
    %c0_5 = arith.constant 0 : index
    %c0_6 = arith.constant 0 : index
    %9 = vector.load %arg3[%c0_5, %c0_6] : memref<128x32xf32, #tpu.memory_space<vmem>>, vector<128x32xf32>
    %10 = arith.mulf %8, %8 : vector<128x32xf32>
    %cst = arith.constant dense<0.000000e+00> : vector<128xf32>
    %11 = vector.multi_reduction <add>, %10, %cst [1] : vector<128x32xf32> to vector<128xf32>
    %12 = vector.shape_cast %11 : vector<128xf32> to vector<128x1xf32>
    %13 = arith.mulf %9, %9 : vector<128x32xf32>
    %cst_7 = arith.constant dense<0.000000e+00> : vector<128xf32>
    %14 = vector.multi_reduction <add>, %13, %cst_7 [1] : vector<128x32xf32> to vector<128xf32>
    %15 = vector.shape_cast %14 : vector<128xf32> to vector<128x1xf32>
    %cst_8 = arith.constant 0.000000e+00 : f32
    %16 = vector.broadcast %cst_8 : f32 to vector<128x1xf32>
    %17 = arith.cmpf ogt, %12, %16 : vector<128x1xf32>
    %18 = math.sqrt %12 : vector<128x1xf32>
    %cst_9 = arith.constant 1.000000e+00 : f32
    %19 = vector.broadcast %cst_9 : f32 to vector<128x1xf32>
    %20 = arith.divf %19, %18 : vector<128x1xf32>
    %cst_10 = arith.constant 0.000000e+00 : f32
    %21 = vector.broadcast %cst_10 : f32 to vector<128x1xf32>
    %22 = arith.select %17, %20, %21 : vector<128x1xi1>, vector<128x1xf32>
    %23 = vector.broadcast %22 : vector<128x1xf32> to vector<128x32xf32>
    %24 = arith.mulf %8, %23 : vector<128x32xf32>
    %cst_11 = arith.constant 0.000000e+00 : f32
    %25 = vector.broadcast %cst_11 : f32 to vector<128x1xf32>
    %26 = arith.cmpf ogt, %15, %25 : vector<128x1xf32>
    %27 = math.sqrt %15 : vector<128x1xf32>
    %cst_12 = arith.constant 1.000000e+00 : f32
    %28 = vector.broadcast %cst_12 : f32 to vector<128x1xf32>
    %29 = arith.divf %28, %27 : vector<128x1xf32>
    %cst_13 = arith.constant 0.000000e+00 : f32
    %30 = vector.broadcast %cst_13 : f32 to vector<128x1xf32>
    %31 = arith.select %26, %29, %30 : vector<128x1xi1>, vector<128x1xf32>
    %32 = vector.broadcast %31 : vector<128x1xf32> to vector<128x32xf32>
    %33 = arith.mulf %9, %32 : vector<128x32xf32>
    %cst_14 = arith.constant dense<0.000000e+00> : vector<128x128xf32>
    %34 = tpu.matmul %24, %33, %cst_14 {dimension_numbers = #tpu.dot_dimension_numbers<[1], [1], [0], [0], [0, 0, 1, 0], [], []>} : vector<128x32xf32>, vector<128x32xf32>, vector<128x128xf32> -> vector<128x128xf32>
    %c0_15 = arith.constant 0 : index
    %c0_16 = arith.constant 0 : index
    %35 = vector.load %arg4[%c0_15, %c0_16] : memref<128x1xi32, #tpu.memory_space<vmem>>, vector<128x1xi32>
    %c0_17 = arith.constant 0 : index
    %c0_18 = arith.constant 0 : index
    %36 = vector.load %arg5[%c0_17, %c0_18] : memref<1x128xi32, #tpu.memory_space<vmem>>, vector<1x128xi32>
    %37 = vector.broadcast %35 : vector<128x1xi32> to vector<128x128xi32>
    %38 = vector.broadcast %36 : vector<1x128xi32> to vector<128x128xi32>
    %39 = arith.cmpi eq, %37, %38 : vector<128x128xi32>
    %40 = arith.extui %39 : vector<128x128xi1> to vector<128x128xi32>
    %41 = arith.sitofp %40 : vector<128x128xi32> to vector<128x128xf32>
    %cst_19 = arith.constant 5.000000e-01 : f32
    %42 = vector.broadcast %cst_19 : f32 to vector<128x128xf32>
    %43 = arith.subf %42, %34 : vector<128x128xf32>
    %cst_20 = arith.constant 0.000000e+00 : f32
    %44 = vector.broadcast %cst_20 : f32 to vector<128x128xf32>
    %45 = arith.maximumf %43, %44 : vector<128x128xf32>
    %46 = arith.mulf %45, %45 : vector<128x128xf32>
    %cst_21 = arith.constant 1.000000e+00 : f32
    %47 = vector.broadcast %cst_21 : f32 to vector<128x128xf32>
    %48 = arith.subf %47, %41 : vector<128x128xf32>
    %cst_22 = arith.constant 1.000000e+30 : f32
    %49 = vector.broadcast %cst_22 : f32 to vector<128x128xf32>
    %50 = arith.mulf %48, %49 : vector<128x128xf32>
    %51 = arith.subf %46, %50 : vector<128x128xf32>
    %cst_23 = arith.constant 0.000000e+00 : f32
    %52 = vector.broadcast %cst_23 : f32 to vector<128x128xf32>
    %53 = arith.maximumf %34, %52 : vector<128x128xf32>
    %54 = arith.mulf %53, %53 : vector<128x128xf32>
    %cst_24 = arith.constant 1.000000e+30 : f32
    %55 = vector.broadcast %cst_24 : f32 to vector<128x128xf32>
    %56 = arith.mulf %41, %55 : vector<128x128xf32>
    %57 = arith.subf %54, %56 : vector<128x128xf32>
    %58 = tpu.iota {dimensions = array<i32: 1>} : vector<128x128xi32>
    %c128_i32 = arith.constant 128 : i32
    %59 = arith.muli %arg1, %c128_i32 : i32
    %60 = vector.broadcast %59 : i32 to vector<128x128xi32>
    %61 = arith.addi %58, %60 : vector<128x128xi32>
    %c8_i32 = arith.constant 8 : i32
    %62 = vector.broadcast %c8_i32 : i32 to vector<128x128xi32>
    %63 = arith.cmpi slt, %61, %62 : vector<128x128xi32>
    %cst_25 = arith.constant 0xFF800000 : f32
    %64 = vector.broadcast %cst_25 : f32 to vector<128x128xf32>
    %65 = arith.select %63, %51, %64 : vector<128x128xi1>, vector<128x128xf32>
    %cst_26 = arith.constant 0xFF800000 : f32
    %66 = vector.broadcast %cst_26 : f32 to vector<128x128xf32>
    %67 = arith.select %63, %57, %66 : vector<128x128xi1>, vector<128x128xf32>
    %c0_27 = arith.constant 0 : index
    %c0_28 = arith.constant 0 : index
    %68 = vector.load %arg7[%c0_27, %c0_28] : memref<128x1xf32, #tpu.memory_space<vmem>>, vector<128x1xf32>
    %cst_29 = arith.constant dense<0xFF800000> : vector<128xf32>
    %69 = vector.multi_reduction <maximumf>, %65, %cst_29 [1] : vector<128x128xf32> to vector<128xf32>
    %70 = vector.shape_cast %69 : vector<128xf32> to vector<128x1xf32>
    %71 = arith.maximumf %68, %70 : vector<128x1xf32>
    %c0_30 = arith.constant 0 : index
    %c0_31 = arith.constant 0 : index
    %72 = vector.load %arg7[%c0_30, %c0_31] : memref<128x1xf32, #tpu.memory_space<vmem>>, vector<128x1xf32>
    tpu.vector_store %arg7[%c0_30, %c0_31], %71 {strides = array<i32>} : memref<128x1xf32, #tpu.memory_space<vmem>>, vector<128x1xf32>,
    %c0_32 = arith.constant 0 : index
    %c0_33 = arith.constant 0 : index
    %73 = vector.load %arg8[%c0_32, %c0_33] : memref<128x1xf32, #tpu.memory_space<vmem>>, vector<128x1xf32>
    %cst_34 = arith.constant dense<0xFF800000> : vector<128xf32>
    %74 = vector.multi_reduction <maximumf>, %67, %cst_34 [1] : vector<128x128xf32> to vector<128xf32>
    %75 = vector.shape_cast %74 : vector<128xf32> to vector<128x1xf32>
    %76 = arith.maximumf %73, %75 : vector<128x1xf32>
    %c0_35 = arith.constant 0 : index
    %c0_36 = arith.constant 0 : index
    %77 = vector.load %arg8[%c0_35, %c0_36] : memref<128x1xf32, #tpu.memory_space<vmem>>, vector<128x1xf32>
    tpu.vector_store %arg8[%c0_35, %c0_36], %76 {strides = array<i32>} : memref<128x1xf32, #tpu.memory_space<vmem>>, vector<128x1xf32>,
    %c0_i32_37 = arith.constant 0 : i32
    %78 = arith.cmpi eq, %arg1, %c0_i32_37 : i32
    %79 = arith.extui %78 : i1 to i32
    %c0_i32_38 = arith.constant 0 : i32
    %80 = arith.cmpi ne, %79, %c0_i32_38 : i32
    scf.if %80 {
      %86 = tpu.iota {dimensions = array<i32: 0>} : vector<128x1xi32>
      %c128_i32_42 = arith.constant 128 : i32
      %87 = arith.muli %arg0, %c128_i32_42 : i32
      %88 = vector.broadcast %87 : i32 to vector<128x1xi32>
      %89 = arith.addi %86, %88 : vector<128x1xi32>
      %c8_i32_43 = arith.constant 8 : i32
      %90 = vector.broadcast %c8_i32_43 : i32 to vector<128x1xi32>
      %91 = arith.cmpi slt, %89, %90 : vector<128x1xi32>
      %c0_44 = arith.constant 0 : index
      %c0_45 = arith.constant 0 : index
      %92 = vector.load %arg7[%c0_44, %c0_45] : memref<128x1xf32, #tpu.memory_space<vmem>>, vector<128x1xf32>
      %c0_46 = arith.constant 0 : index
      %c0_47 = arith.constant 0 : index
      %93 = vector.load %arg8[%c0_46, %c0_47] : memref<128x1xf32, #tpu.memory_space<vmem>>, vector<128x1xf32>
      %94 = arith.addf %92, %93 : vector<128x1xf32>
      %cst_48 = arith.constant 0.000000e+00 : f32
      %95 = vector.broadcast %cst_48 : f32 to vector<128x1xf32>
      %96 = arith.select %91, %94, %95 : vector<128x1xi1>, vector<128x1xf32>
      %c0_49 = arith.constant 0 : index
      %c0_50 = arith.constant 0 : index
      %97 = memref.load %arg9[%c0_49, %c0_50] : memref<1x1xf32, #tpu.memory_space<smem>>
      %98 = vector.shape_cast %96 : vector<128x1xf32> to vector<1x128x1xf32>
      %cst_51 = arith.constant dense<0.000000e+00> : vector<1xf32>
      %99 = vector.multi_reduction <add>, %98, %cst_51 [1, 2] : vector<1x128x1xf32> to vector<1xf32>
      %100 = vector.shape_cast %99 : vector<1xf32> to vector<1x1x1xf32>
      %101 = vector.extract %100[0, 0, 0] : f32 from vector<1x1x1xf32>
      %102 = arith.addf %97, %101 : f32
      %c0_52 = arith.constant 0 : index
      %c0_53 = arith.constant 0 : index
      %103 = memref.load %arg9[%c0_52, %c0_53] : memref<1x1xf32, #tpu.memory_space<smem>>
      memref.store %102, %arg9[%c0_52, %c0_53] : memref<1x1xf32, #tpu.memory_space<smem>>
    } else {
    }
    %c0_i32_39 = arith.constant 0 : i32
    %81 = arith.cmpi eq, %arg0, %c0_i32_39 : i32
    %c0_i32_40 = arith.constant 0 : i32
    %82 = arith.cmpi eq, %arg1, %c0_i32_40 : i32
    %83 = arith.andi %81, %82 : i1
    %84 = arith.extui %83 : i1 to i32
    %c0_i32_41 = arith.constant 0 : i32
    %85 = arith.cmpi ne, %84, %c0_i32_41 : i32
    scf.if %85 {
      %c0_42 = arith.constant 0 : index
      %c0_43 = arith.constant 0 : index
      %86 = memref.load %arg9[%c0_42, %c0_43] : memref<1x1xf32, #tpu.memory_space<smem>>
      %87 = vector.broadcast %86 : f32 to vector<8x128xf32>
      %c0_44 = arith.constant 0 : index
      %c0_45 = arith.constant 0 : index
      %88 = vector.load %arg6[%c0_44, %c0_45] : memref<8x128xf32, #tpu.memory_space<vmem>>, vector<8x128xf32>
      tpu.vector_store %arg6[%c0_44, %c0_45], %87 {strides = array<i32>} : memref<8x128xf32, #tpu.memory_space<vmem>>, vector<8x128xf32>,
    } else {
    }
    return
  }
  func.func @transform_0(%arg0: i32, %arg1: i32) -> (i32, i32) {
    %c0_i32 = arith.constant 0 : i32
    %c0_i32_0 = arith.constant 0 : i32
    return %arg0, %c0_i32 : i32, i32
  }
  func.func @transform_1(%arg0: i32, %arg1: i32) -> (i32, i32) {
    %c0_i32 = arith.constant 0 : i32
    %c0_i32_0 = arith.constant 0 : i32
    return %arg1, %c0_i32 : i32, i32
  }
  func.func @transform_2(%arg0: i32, %arg1: i32) -> (i32, i32) {
    %c0_i32 = arith.constant 0 : i32
    %c0_i32_0 = arith.constant 0 : i32
    return %arg0, %c0_i32 : i32, i32
  }
  func.func @transform_3(%arg0: i32, %arg1: i32) -> (i32, i32) {
    %c0_i32 = arith.constant 0 : i32
    %c0_i32_0 = arith.constant 0 : i32
    return %c0_i32, %arg1 : i32, i32
  }
  func.func @transform_4(%arg0: i32, %arg1: i32) -> (i32, i32) {
    %c0_i32 = arith.constant 0 : i32
    %c0_i32_0 = arith.constant 0 : i32
    %c0_i32_1 = arith.constant 0 : i32
    return %c0_i32, %c0_i32_0 : i32, i32
  }
}

</mosaic_0001>

<llo_original>
// kernel: tpu_custom_call.1
$region0: #{tpu_custom_call.1}
  #allocation0 [shape = 'u32[]', space=smem, size = 0x4, offset = 0x4, fixed_abs, tag = 'smem constant byte address 0x4 - core index']
  #allocation1 [shape = 'u32[72,128]{1,0:T(1,128)}', space=vmem, size = 0x9000, scoped, tag = 'internal scratch']
  #allocation2 [shape = 'f32[128,1]{1,0:T(8,128)}', space=vmem, size = 0x10000, scoped, tag = 'scratch operand']
  #allocation3 [shape = 'f32[128,1]{1,0:T(8,128)}', space=vmem, size = 0x10000, scoped, tag = 'scratch operand']
  #allocation4 [shape = 'f32[1,1]{1,0:T(1,128)}', space=smem, size = 0x200, scoped, tag = 'scratch operand']
  %s0 = inlined_call_operand.vmem [shape: f32[128,32], index: 0, kind: input, shape index: {}]
  %s1 = inlined_call_operand.vmem [shape: f32[128,32], index: 1, kind: input, shape index: {}]
  %s2 = inlined_call_operand.vmem [shape: s32[128,1], index: 2, kind: input, shape index: {}]
  %s3 = inlined_call_operand.vmem [shape: s32[1,128], index: 3, kind: input, shape index: {}]
  %s4 = inlined_call_operand.hbm [shape: f32[8,128], index: 4, kind: output, shape index: {}]
  %s5 = sld [smem:[#allocation0]]
  $region42: #{tpu_custom_call.1} parent=0
    _
  %s7 = ssub.s32 1, %s5
  %s8 = scalar_select 0, %s7, %s5
  $region1: #{tpu_custom_call.1} parent=0
    #allocation5 [shape = 'u8[4096]{0}', space=vmem, size = 0x1000, scoped, tag = 'output window, operand 0, single buffered']
    #allocation6 [shape = 's32[1]{0}', space=sflag, size = 0x4, scoped, tag = 'scoped memory for tpu_custom_call.1']
    %9 = vsyncpa [#allocation6], 0
    // Predicated region
    $region2: #{tpu_custom_call.1} parent=1 // pred_check
      _
    $region3: #{tpu_custom_call.1} parent=1 // pred_check_branch
      %11 = sbr.rel (0) target = $region5
    $region4: #{tpu_custom_call.1} parent=1 // pred_region
      _
    $region5: #{tpu_custom_call.1} parent=1 // pred_fallthru
      _
    // Predicated region
    $region6: #{tpu_custom_call.1} parent=1 // pred_check
      _
    $region7: #{tpu_custom_call.1} parent=1 // pred_check_branch
      %13 = sbr.rel (0) target = $region9
    $region8: #{tpu_custom_call.1} parent=1 // pred_region
      _
    $region9: #{tpu_custom_call.1} parent=1 // pred_fallthru
      _
    // Predicated region
    $region10: #{tpu_custom_call.1} parent=1 // pred_check
      _
    $region11: #{tpu_custom_call.1} parent=1 // pred_check_branch
      %15 = sbr.rel (0) target = $region13
    $region12: #{tpu_custom_call.1} parent=1 // pred_region
      _
    $region13: #{tpu_custom_call.1} parent=1 // pred_fallthru
      _
    // Predicated region
    $region14: #{tpu_custom_call.1} parent=1 // pred_check
      _
    $region15: #{tpu_custom_call.1} parent=1 // pred_check_branch
      %17 = sbr.rel (0) target = $region17
    $region16: #{tpu_custom_call.1} parent=1 // pred_region
      _
    $region17: #{tpu_custom_call.1} parent=1 // pred_fallthru
      _
    %p18 = scmp.eq.s32.totalorder 0, 0
    %p19 = scmp.eq.s32.totalorder 0, 0
    %p20 = pnand %p18, %p19
    %p21 = pneg %p20
    // Predicated region
    $region18: #{tpu_custom_call.1} parent=1 // pred_check
      _
    $region19: #{tpu_custom_call.1} parent=1 // pred_check_branch
      %23 = sbr.rel (%p20) target = $region21
    $region20: #{tpu_custom_call.1} parent=1 // pred_region
      %s24 = scalar_lea.smem [#allocation4], 0
      %25 = sst [smem:[%s24]] 0.0
    $region21: #{tpu_custom_call.1} parent=1 // pred_fallthru
      _
    // Predicated region
    $region22: #{tpu_custom_call.1} parent=1 // pred_check
      %p26 = pneg %p19
    $region23: #{tpu_custom_call.1} parent=1 // pred_check_branch
      %28 = sbr.rel (%p26) target = $region25
    $region24: #{tpu_custom_call.1} parent=1 // pred_region
      %vm29 = vcmask 7168
      %30 = vst.msk [vmem:[#allocation2] sm:$0xff] %vm29, -inf
      %31 = vst.msk [vmem:[#allocation2 + $0x8] sm:$0xff] %vm29, -inf
      %32 = vst.msk [vmem:[#allocation2 + $0x10] sm:$0xff] %vm29, -inf
      %33 = vst.msk [vmem:[#allocation2 + $0x18] sm:$0xff] %vm29, -inf
      %34 = vst.msk [vmem:[#allocation2 + $0x20] sm:$0xff] %vm29, -inf
      %35 = vst.msk [vmem:[#allocation2 + $0x28] sm:$0xff] %vm29, -inf
      %36 = vst.msk [vmem:[#allocation2 + $0x30] sm:$0xff] %vm29, -inf
      %37 = vst.msk [vmem:[#allocation2 + $0x38] sm:$0xff] %vm29, -inf
      %38 = vst.msk [vmem:[#allocation2 + $0x40] sm:$0xff] %vm29, -inf
      %39 = vst.msk [vmem:[#allocation2 + $0x48] sm:$0xff] %vm29, -inf
      %40 = vst.msk [vmem:[#allocation2 + $0x50] sm:$0xff] %vm29, -inf
      %41 = vst.msk [vmem:[#allocation2 + $0x58] sm:$0xff] %vm29, -inf
      %42 = vst.msk [vmem:[#allocation2 + $0x60] sm:$0xff] %vm29, -inf
      %43 = vst.msk [vmem:[#allocation2 + $0x68] sm:$0xff] %vm29, -inf
      %44 = vst.msk [vmem:[#allocation2 + $0x70] sm:$0xff] %vm29, -inf
      %45 = vst.msk [vmem:[#allocation2 + $0x78] sm:$0xff] %vm29, -inf
      %46 = vst.msk [vmem:[#allocation3] sm:$0xff] %vm29, -inf
      %47 = vst.msk [vmem:[#allocation3 + $0x8] sm:$0xff] %vm29, -inf
      %48 = vst.msk [vmem:[#allocation3 + $0x10] sm:$0xff] %vm29, -inf
      %49 = vst.msk [vmem:[#allocation3 + $0x18] sm:$0xff] %vm29, -inf
      %50 = vst.msk [vmem:[#allocation3 + $0x20] sm:$0xff] %vm29, -inf
      %51 = vst.msk [vmem:[#allocation3 + $0x28] sm:$0xff] %vm29, -inf
      %52 = vst.msk [vmem:[#allocation3 + $0x30] sm:$0xff] %vm29, -inf
      %53 = vst.msk [vmem:[#allocation3 + $0x38] sm:$0xff] %vm29, -inf
      %54 = vst.msk [vmem:[#allocation3 + $0x40] sm:$0xff] %vm29, -inf
      %55 = vst.msk [vmem:[#allocation3 + $0x48] sm:$0xff] %vm29, -inf
      %56 = vst.msk [vmem:[#allocation3 + $0x50] sm:$0xff] %vm29, -inf
      %57 = vst.msk [vmem:[#allocation3 + $0x58] sm:$0xff] %vm29, -inf
      %58 = vst.msk [vmem:[#allocation3 + $0x60] sm:$0xff] %vm29, -inf
      %59 = vst.msk [vmem:[#allocation3 + $0x68] sm:$0xff] %vm29, -inf
      %60 = vst.msk [vmem:[#allocation3 + $0x70] sm:$0xff] %vm29, -inf
      %61 = vst.msk [vmem:[#allocation3 + $0x78] sm:$0xff] %vm29, -inf
    $region25: #{tpu_custom_call.1} parent=1 // pred_fallthru
      _
    %v62 = vld [vmem:[%s0] sm:$0xff]
    %v63 = vld [vmem:[%s0 + $0x8] sm:$0xff]
    %v64 = vld [vmem:[%s0 + $0x10] sm:$0xff]
    %v65 = vld [vmem:[%s0 + $0x18] sm:$0xff]
    %v66 = vld [vmem:[%s0 + $0x20] sm:$0xff]
    %v67 = vld [vmem:[%s0 + $0x28] sm:$0xff]
    %v68 = vld [vmem:[%s0 + $0x30] sm:$0xff]
    %v69 = vld [vmem:[%s0 + $0x38] sm:$0xff]
    %v70 = vld [vmem:[%s0 + $0x40] sm:$0xff]
    %v71 = vld [vmem:[%s0 + $0x48] sm:$0xff]
    %v72 = vld [vmem:[%s0 + $0x50] sm:$0xff]
    %v73 = vld [vmem:[%s0 + $0x58] sm:$0xff]
    %v74 = vld [vmem:[%s0 + $0x60] sm:$0xff]
    %v75 = vld [vmem:[%s0 + $0x68] sm:$0xff]
    %v76 = vld [vmem:[%s0 + $0x70] sm:$0xff]
    %v77 = vld [vmem:[%s0 + $0x78] sm:$0xff]
    %v78 = vld [vmem:[%s1] sm:$0xff]
    %v79 = vld [vmem:[%s1 + $0x8] sm:$0xff]
    %v80 = vld [vmem:[%s1 + $0x10] sm:$0xff]
    %v81 = vld [vmem:[%s1 + $0x18] sm:$0xff]
    %v82 = vld [vmem:[%s1 + $0x20] sm:$0xff]
    %v83 = vld [vmem:[%s1 + $0x28] sm:$0xff]
    %v84 = vld [vmem:[%s1 + $0x30] sm:$0xff]
    %v85 = vld [vmem:[%s1 + $0x38] sm:$0xff]
    %v86 = vld [vmem:[%s1 + $0x40] sm:$0xff]
    %v87 = vld [vmem:[%s1 + $0x48] sm:$0xff]
    %v88 = vld [vmem:[%s1 + $0x50] sm:$0xff]
    %v89 = vld [vmem:[%s1 + $0x58] sm:$0xff]
    %v90 = vld [vmem:[%s1 + $0x60] sm:$0xff]
    %v91 = vld [vmem:[%s1 + $0x68] sm:$0xff]
    %v92 = vld [vmem:[%s1 + $0x70] sm:$0xff]
    %v93 = vld [vmem:[%s1 + $0x78] sm:$0xff]
    %v94 = vmul.f32 %v62, %v62
    %v95 = vmul.f32 %v63, %v63
    %v96 = vmul.f32 %v64, %v64
    %v97 = vmul.f32 %v65, %v65
    %v98 = vmul.f32 %v66, %v66
    %v99 = vmul.f32 %v67, %v67
    %v100 = vmul.f32 %v68, %v68
    %v101 = vmul.f32 %v69, %v69
    %v102 = vmul.f32 %v70, %v70
    %v103 = vmul.f32 %v71, %v71
    %v104 = vmul.f32 %v72, %v72
    %v105 = vmul.f32 %v73, %v73
    %v106 = vmul.f32 %v74, %v74
    %v107 = vmul.f32 %v75, %v75
    %v108 = vmul.f32 %v76, %v76
    %v109 = vmul.f32 %v77, %v77
    %vm110 = vcmask 261120
    %v111 = vsel %vm110, %v94, 0.0
    %112 = vadd.xlane.f32.xlu0 %v111
    %v113 = vpop.xlane.xlu0 %112
    %v114 = vsel %vm110, %v95, 0.0
    %115 = vadd.xlane.f32.xlu0 %v114
    %v116 = vpop.xlane.xlu0 %115
    %v117 = vsel %vm110, %v96, 0.0
    %118 = vadd.xlane.f32.xlu0 %v117
    %v119 = vpop.xlane.xlu0 %118
    %v120 = vsel %vm110, %v97, 0.0
    %121 = vadd.xlane.f32.xlu0 %v120
    %v122 = vpop.xlane.xlu0 %121
    %v123 = vsel %vm110, %v98, 0.0
    %124 = vadd.xlane.f32.xlu0 %v123
    %v125 = vpop.xlane.xlu0 %124
    %v126 = vsel %vm110, %v99, 0.0
    %127 = vadd.xlane.f32.xlu0 %v126
    %v128 = vpop.xlane.xlu0 %127
    %v129 = vsel %vm110, %v100, 0.0
    %130 = vadd.xlane.f32.xlu0 %v129
    %v131 = vpop.xlane.xlu0 %130
    %v132 = vsel %vm110, %v101, 0.0
    %133 = vadd.xlane.f32.xlu0 %v132
    %v134 = vpop.xlane.xlu0 %133
    %v135 = vsel %vm110, %v102, 0.0
    %136 = vadd.xlane.f32.xlu0 %v135
    %v137 = vpop.xlane.xlu0 %136
    %v138 = vsel %vm110, %v103, 0.0
    %139 = vadd.xlane.f32.xlu0 %v138
    %v140 = vpop.xlane.xlu0 %139
    %v141 = vsel %vm110, %v104, 0.0
    %142 = vadd.xlane.f32.xlu0 %v141
    %v143 = vpop.xlane.xlu0 %142
    %v144 = vsel %vm110, %v105, 0.0
    %145 = vadd.xlane.f32.xlu0 %v144
    %v146 = vpop.xlane.xlu0 %145
    %v147 = vsel %vm110, %v106, 0.0
    %148 = vadd.xlane.f32.xlu0 %v147
    %v149 = vpop.xlane.xlu0 %148
    %v150 = vsel %vm110, %v107, 0.0
    %151 = vadd.xlane.f32.xlu0 %v150
    %v152 = vpop.xlane.xlu0 %151
    %v153 = vsel %vm110, %v108, 0.0
    %154 = vadd.xlane.f32.xlu0 %v153
    %v155 = vpop.xlane.xlu0 %154
    %v156 = vsel %vm110, %v109, 0.0
    %157 = vadd.xlane.f32.xlu0 %v156
    %v158 = vpop.xlane.xlu0 %157
    %v159 = vmul.f32 %v78, %v78
    %v160 = vmul.f32 %v79, %v79
    %v161 = vmul.f32 %v80, %v80
    %v162 = vmul.f32 %v81, %v81
    %v163 = vmul.f32 %v82, %v82
    %v164 = vmul.f32 %v83, %v83
    %v165 = vmul.f32 %v84, %v84
    %v166 = vmul.f32 %v85, %v85
    %v167 = vmul.f32 %v86, %v86
    %v168 = vmul.f32 %v87, %v87
    %v169 = vmul.f32 %v88, %v88
    %v170 = vmul.f32 %v89, %v89
    %v171 = vmul.f32 %v90, %v90
    %v172 = vmul.f32 %v91, %v91
    %v173 = vmul.f32 %v92, %v92
    %v174 = vmul.f32 %v93, %v93
    %v175 = vsel %vm110, %v159, 0.0
    %176 = vadd.xlane.f32.xlu0 %v175
    %v177 = vpop.xlane.xlu0 %176
    %v178 = vsel %vm110, %v160, 0.0
    %179 = vadd.xlane.f32.xlu0 %v178
    %v180 = vpop.xlane.xlu0 %179
    %v181 = vsel %vm110, %v161, 0.0
    %182 = vadd.xlane.f32.xlu0 %v181
    %v183 = vpop.xlane.xlu0 %182
    %v184 = vsel %vm110, %v162, 0.0
    %185 = vadd.xlane.f32.xlu0 %v184
    %v186 = vpop.xlane.xlu0 %185
    %v187 = vsel %vm110, %v163, 0.0
    %188 = vadd.xlane.f32.xlu0 %v187
    %v189 = vpop.xlane.xlu0 %188
    %v190 = vsel %vm110, %v164, 0.0
    %191 = vadd.xlane.f32.xlu0 %v190
    %v192 = vpop.xlane.xlu0 %191
    %v193 = vsel %vm110, %v165, 0.0
    %194 = vadd.xlane.f32.xlu0 %v193
    %v195 = vpop.xlane.xlu0 %194
    %v196 = vsel %vm110, %v166, 0.0
    %197 = vadd.xlane.f32.xlu0 %v196
    %v198 = vpop.xlane.xlu0 %197
    %v199 = vsel %vm110, %v167, 0.0
    %200 = vadd.xlane.f32.xlu0 %v199
    %v201 = vpop.xlane.xlu0 %200
    %v202 = vsel %vm110, %v168, 0.0
    %203 = vadd.xlane.f32.xlu0 %v202
    %v204 = vpop.xlane.xlu0 %203
    %v205 = vsel %vm110, %v169, 0.0
    %206 = vadd.xlane.f32.xlu0 %v205
    %v207 = vpop.xlane.xlu0 %206
    %v208 = vsel %vm110, %v170, 0.0
    %209 = vadd.xlane.f32.xlu0 %v208
    %v210 = vpop.xlane.xlu0 %209
    %v211 = vsel %vm110, %v171, 0.0
    %212 = vadd.xlane.f32.xlu0 %v211
    %v213 = vpop.xlane.xlu0 %212
    %v214 = vsel %vm110, %v172, 0.0
    %215 = vadd.xlane.f32.xlu0 %v214
    %v216 = vpop.xlane.xlu0 %215
    %v217 = vsel %vm110, %v173, 0.0
    %218 = vadd.xlane.f32.xlu0 %v217
    %v219 = vpop.xlane.xlu0 %218
    %v220 = vsel %vm110, %v174, 0.0
    %221 = vadd.xlane.f32.xlu0 %v220
    %v222 = vpop.xlane.xlu0 %221
    %vm223 = vcmp.gt.f32.partialorder %v113, 0.0
    %vm224 = vcmp.gt.f32.partialorder %v116, 0.0
    %vm225 = vcmp.gt.f32.partialorder %v119, 0.0
    %vm226 = vcmp.gt.f32.partialorder %v122, 0.0
    %vm227 = vcmp.gt.f32.partialorder %v125, 0.0
    %vm228 = vcmp.gt.f32.partialorder %v128, 0.0
    %vm229 = vcmp.gt.f32.partialorder %v131, 0.0
    %vm230 = vcmp.gt.f32.partialorder %v134, 0.0
    %vm231 = vcmp.gt.f32.partialorder %v137, 0.0
    %vm232 = vcmp.gt.f32.partialorder %v140, 0.0
    %vm233 = vcmp.gt.f32.partialorder %v143, 0.0
    %vm234 = vcmp.gt.f32.partialorder %v146, 0.0
    %vm235 = vcmp.gt.f32.partialorder %v149, 0.0
    %vm236 = vcmp.gt.f32.partialorder %v152, 0.0
    %vm237 = vcmp.gt.f32.partialorder %v155, 0.0
    %vm238 = vcmp.gt.f32.partialorder %v158, 0.0
    %v239 = vrsqrt.pop %v113
    %v240 = vmul.f32 %v239, %v113
    %v241 = vmul.f32 %v240, %v239
    %v242 = vmul.f32 0.5, %v241
    %v243 = vsub.f32 1.5, %v242
    %v244 = vmul.f32 %v239, %v243
    %v245 = vmul.f32 %v113, %v244
    %vm246 = vcmp.eq.f32.partialorder %v113, inf
    %v247 = vsel %vm246, %v113, %v245
    %vm248 = vcmp.eq.f32.partialorder %v113, 0.0
    %v249 = vand.u32 %v113, 2147483648
    %v250 = vsel %vm248, %v249, %v247
    %v251 = vrsqrt.pop %v116
    %v252 = vmul.f32 %v251, %v116
    %v253 = vmul.f32 %v252, %v251
    %v254 = vmul.f32 0.5, %v253
    %v255 = vsub.f32 1.5, %v254
    %v256 = vmul.f32 %v251, %v255
    %v257 = vmul.f32 %v116, %v256
    %vm258 = vcmp.eq.f32.partialorder %v116, inf
    %v259 = vsel %vm258, %v116, %v257
    %vm260 = vcmp.eq.f32.partialorder %v116, 0.0
    %v261 = vand.u32 %v116, 2147483648
    %v262 = vsel %vm260, %v261, %v259
    %v263 = vrsqrt.pop %v119
    %v264 = vmul.f32 %v263, %v119
    %v265 = vmul.f32 %v264, %v263
    %v266 = vmul.f32 0.5, %v265
    %v267 = vsub.f32 1.5, %v266
    %v268 = vmul.f32 %v263, %v267
    %v269 = vmul.f32 %v119, %v268
    %vm270 = vcmp.eq.f32.partialorder %v119, inf
    %v271 = vsel %vm270, %v119, %v269
    %vm272 = vcmp.eq.f32.partialorder %v119, 0.0
    %v273 = vand.u32 %v119, 2147483648
    %v274 = vsel %vm272, %v273, %v271
    %v275 = vrsqrt.pop %v122
    %v276 = vmul.f32 %v275, %v122
    %v277 = vmul.f32 %v276, %v275
    %v278 = vmul.f32 0.5, %v277
    %v279 = vsub.f32 1.5, %v278
    %v280 = vmul.f32 %v275, %v279
    %v281 = vmul.f32 %v122, %v280
    %vm282 = vcmp.eq.f32.partialorder %v122, inf
    %v283 = vsel %vm282, %v122, %v281
    %vm284 = vcmp.eq.f32.partialorder %v122, 0.0
    %v285 = vand.u32 %v122, 2147483648
    %v286 = vsel %vm284, %v285, %v283
    %v287 = vrsqrt.pop %v125
    %v288 = vmul.f32 %v287, %v125
    %v289 = vmul.f32 %v288, %v287
    %v290 = vmul.f32 0.5, %v289
    %v291 = vsub.f32 1.5, %v290
    %v292 = vmul.f32 %v287, %v291
    %v293 = vmul.f32 %v125, %v292
    %vm294 = vcmp.eq.f32.partialorder %v125, inf
    %v295 = vsel %vm294, %v125, %v293
    %vm296 = vcmp.eq.f32.partialorder %v125, 0.0
    %v297 = vand.u32 %v125, 2147483648
    %v298 = vsel %vm296, %v297, %v295
    %v299 = vrsqrt.pop %v128
    %v300 = vmul.f32 %v299, %v128
    %v301 = vmul.f32 %v300, %v299
    %v302 = vmul.f32 0.5, %v301
    %v303 = vsub.f32 1.5, %v302
    %v304 = vmul.f32 %v299, %v303
    %v305 = vmul.f32 %v128, %v304
    %vm306 = vcmp.eq.f32.partialorder %v128, inf
    %v307 = vsel %vm306, %v128, %v305
    %vm308 = vcmp.eq.f32.partialorder %v128, 0.0
    %v309 = vand.u32 %v128, 2147483648
    %v310 = vsel %vm308, %v309, %v307
    %v311 = vrsqrt.pop %v131
    %v312 = vmul.f32 %v311, %v131
    %v313 = vmul.f32 %v312, %v311
    %v314 = vmul.f32 0.5, %v313
    %v315 = vsub.f32 1.5, %v314
    %v316 = vmul.f32 %v311, %v315
    %v317 = vmul.f32 %v131, %v316
    %vm318 = vcmp.eq.f32.partialorder %v131, inf
    %v319 = vsel %vm318, %v131, %v317
    %vm320 = vcmp.eq.f32.partialorder %v131, 0.0
    %v321 = vand.u32 %v131, 2147483648
    %v322 = vsel %vm320, %v321, %v319
    %v323 = vrsqrt.pop %v134
    %v324 = vmul.f32 %v323, %v134
    %v325 = vmul.f32 %v324, %v323
    %v326 = vmul.f32 0.5, %v325
    %v327 = vsub.f32 1.5, %v326
    %v328 = vmul.f32 %v323, %v327
    %v329 = vmul.f32 %v134, %v328
    %vm330 = vcmp.eq.f32.partialorder %v134, inf
    %v331 = vsel %vm330, %v134, %v329
    %vm332 = vcmp.eq.f32.partialorder %v134, 0.0
    %v333 = vand.u32 %v134, 2147483648
    %v334 = vsel %vm332, %v333, %v331
    %v335 = vrsqrt.pop %v137
    %v336 = vmul.f32 %v335, %v137
    %v337 = vmul.f32 %v336, %v335
    %v338 = vmul.f32 0.5, %v337
    %v339 = vsub.f32 1.5, %v338
    %v340 = vmul.f32 %v335, %v339
    %v341 = vmul.f32 %v137, %v340
    %vm342 = vcmp.eq.f32.partialorder %v137, inf
    %v343 = vsel %vm342, %v137, %v341
    %vm344 = vcmp.eq.f32.partialorder %v137, 0.0
    %v345 = vand.u32 %v137, 2147483648
    %v346 = vsel %vm344, %v345, %v343
    %v347 = vrsqrt.pop %v140
    %v348 = vmul.f32 %v347, %v140
    %v349 = vmul.f32 %v348, %v347
    %v350 = vmul.f32 0.5, %v349
    %v351 = vsub.f32 1.5, %v350
    %v352 = vmul.f32 %v347, %v351
    %v353 = vmul.f32 %v140, %v352
    %vm354 = vcmp.eq.f32.partialorder %v140, inf
    %v355 = vsel %vm354, %v140, %v353
    %vm356 = vcmp.eq.f32.partialorder %v140, 0.0
    %v357 = vand.u32 %v140, 2147483648
    %v358 = vsel %vm356, %v357, %v355
    %v359 = vrsqrt.pop %v143
    %v360 = vmul.f32 %v359, %v143
    %v361 = vmul.f32 %v360, %v359
    %v362 = vmul.f32 0.5, %v361
    %v363 = vsub.f32 1.5, %v362
    %v364 = vmul.f32 %v359, %v363
    %v365 = vmul.f32 %v143, %v364
    %vm366 = vcmp.eq.f32.partialorder %v143, inf
    %v367 = vsel %vm366, %v143, %v365
    %vm368 = vcmp.eq.f32.partialorder %v143, 0.0
    %v369 = vand.u32 %v143, 2147483648
    %v370 = vsel %vm368, %v369, %v367
    %v371 = vrsqrt.pop %v146
    %v372 = vmul.f32 %v371, %v146
    %v373 = vmul.f32 %v372, %v371
    %v374 = vmul.f32 0.5, %v373
    %v375 = vsub.f32 1.5, %v374
    %v376 = vmul.f32 %v371, %v375
    %v377 = vmul.f32 %v146, %v376
    %vm378 = vcmp.eq.f32.partialorder %v146, inf
    %v379 = vsel %vm378, %v146, %v377
    %vm380 = vcmp.eq.f32.partialorder %v146, 0.0
    %v381 = vand.u32 %v146, 2147483648
    %v382 = vsel %vm380, %v381, %v379
    %v383 = vrsqrt.pop %v149
    %v384 = vmul.f32 %v383, %v149
    %v385 = vmul.f32 %v384, %v383
    %v386 = vmul.f32 0.5, %v385
    %v387 = vsub.f32 1.5, %v386
    %v388 = vmul.f32 %v383, %v387
    %v389 = vmul.f32 %v149, %v388
    %vm390 = vcmp.eq.f32.partialorder %v149, inf
    %v391 = vsel %vm390, %v149, %v389
    %vm392 = vcmp.eq.f32.partialorder %v149, 0.0
    %v393 = vand.u32 %v149, 2147483648
    %v394 = vsel %vm392, %v393, %v391
    %v395 = vrsqrt.pop %v152
    %v396 = vmul.f32 %v395, %v152
    %v397 = vmul.f32 %v396, %v395
    %v398 = vmul.f32 0.5, %v397
    %v399 = vsub.f32 1.5, %v398
    %v400 = vmul.f32 %v395, %v399
    %v401 = vmul.f32 %v152, %v400
    %vm402 = vcmp.eq.f32.partialorder %v152, inf
    %v403 = vsel %vm402, %v152, %v401
    %vm404 = vcmp.eq.f32.partialorder %v152, 0.0
    %v405 = vand.u32 %v152, 2147483648
    %v406 = vsel %vm404, %v405, %v403
    %v407 = vrsqrt.pop %v155
    %v408 = vmul.f32 %v407, %v155
    %v409 = vmul.f32 %v408, %v407
    %v410 = vmul.f32 0.5, %v409
    %v411 = vsub.f32 1.5, %v410
    %v412 = vmul.f32 %v407, %v411
    %v413 = vmul.f32 %v155, %v412
    %vm414 = vcmp.eq.f32.partialorder %v155, inf
    %v415 = vsel %vm414, %v155, %v413
    %vm416 = vcmp.eq.f32.partialorder %v155, 0.0
    %v417 = vand.u32 %v155, 2147483648
    %v418 = vsel %vm416, %v417, %v415
    %v419 = vrsqrt.pop %v158
    %v420 = vmul.f32 %v419, %v158
    %v421 = vmul.f32 %v420, %v419
    %v422 = vmul.f32 0.5, %v421
    %v423 = vsub.f32 1.5, %v422
    %v424 = vmul.f32 %v419, %v423
    %v425 = vmul.f32 %v158, %v424
    %vm426 = vcmp.eq.f32.partialorder %v158, inf
    %v427 = vsel %vm426, %v158, %v425
    %vm428 = vcmp.eq.f32.partialorder %v158, 0.0
    %v429 = vand.u32 %v158, 2147483648
    %v430 = vsel %vm428, %v429, %v427
    %v431 = vrcp.pop %v250
    %v432 = vmul.f32 %v250, %v431
    %v433 = vsub.f32 1.0, %v432
    %v434 = vmul.f32 %v431, %v433
    %v435 = vadd.f32 %v431, %v434
    %vm436 = vweird.f32 %v250
    %vm437 = vweird.f32 %v431
    %vm438 = vmor %vm436, %vm437
    %v439 = vsel %vm438, %v431, %v435
    %v440 = vand.u32 2147483647, %v250
    %vm441 = vcmp.eq.f32.partialorder %v440, 8.507059e+37
    %v442 = vand.u32 %v250, 2147483648
    %v443 = vor.u32 1.1754944e-38, %v442
    %v444 = vsel %vm441, %v443, %v439
    %v445 = vmul.f32 1.0, %v444
    %v446 = vrcp.pop %v262
    %v447 = vmul.f32 %v262, %v446
    %v448 = vsub.f32 1.0, %v447
    %v449 = vmul.f32 %v446, %v448
    %v450 = vadd.f32 %v446, %v449
    %vm451 = vweird.f32 %v262
    %vm452 = vweird.f32 %v446
    %vm453 = vmor %vm451, %vm452
    %v454 = vsel %vm453, %v446, %v450
    %v455 = vand.u32 2147483647, %v262
    %vm456 = vcmp.eq.f32.partialorder %v455, 8.507059e+37
    %v457 = vand.u32 %v262, 2147483648
    %v458 = vor.u32 1.1754944e-38, %v457
    %v459 = vsel %vm456, %v458, %v454
    %v460 = vmul.f32 1.0, %v459
    %v461 = vrcp.pop %v274
    %v462 = vmul.f32 %v274, %v461
    %v463 = vsub.f32 1.0, %v462
    %v464 = vmul.f32 %v461, %v463
    %v465 = vadd.f32 %v461, %v464
    %vm466 = vweird.f32 %v274
    %vm467 = vweird.f32 %v461
    %vm468 = vmor %vm466, %vm467
    %v469 = vsel %vm468, %v461, %v465
    %v470 = vand.u32 2147483647, %v274
    %vm471 = vcmp.eq.f32.partialorder %v470, 8.507059e+37
    %v472 = vand.u32 %v274, 2147483648
    %v473 = vor.u32 1.1754944e-38, %v472
    %v474 = vsel %vm471, %v473, %v469
    %v475 = vmul.f32 1.0, %v474
    %v476 = vrcp.pop %v286
    %v477 = vmul.f32 %v286, %v476
    %v478 = vsub.f32 1.0, %v477
    %v479 = vmul.f32 %v476, %v478
    %v480 = vadd.f32 %v476, %v479
    %vm481 = vweird.f32 %v286
    %vm482 = vweird.f32 %v476
    %vm483 = vmor %vm481, %vm482
    %v484 = vsel %vm483, %v476, %v480
    %v485 = vand.u32 2147483647, %v286
    %vm486 = vcmp.eq.f32.partialorder %v485, 8.507059e+37
    %v487 = vand.u32 %v286, 2147483648
    %v488 = vor.u32 1.1754944e-38, %v487
    %v489 = vsel %vm486, %v488, %v484
    %v490 = vmul.f32 1.0, %v489
    %v491 = vrcp.pop %v298
    %v492 = vmul.f32 %v298, %v491
    %v493 = vsub.f32 1.0, %v492
    %v494 = vmul.f32 %v491, %v493
    %v495 = vadd.f32 %v491, %v494
    %vm496 = vweird.f32 %v298
    %vm497 = vweird.f32 %v491
    %vm498 = vmor %vm496, %vm497
    %v499 = vsel %vm498, %v491, %v495
    %v500 = vand.u32 2147483647, %v298
    %vm501 = vcmp.eq.f32.partialorder %v500, 8.507059e+37
    %v502 = vand.u32 %v298, 2147483648
    %v503 = vor.u32 1.1754944e-38, %v502
    %v504 = vsel %vm501, %v503, %v499
    %v505 = vmul.f32 1.0, %v504
    %v506 = vrcp.pop %v310
    %v507 = vmul.f32 %v310, %v506
    %v508 = vsub.f32 1.0, %v507
    %v509 = vmul.f32 %v506, %v508
    %v510 = vadd.f32 %v506, %v509
    %vm511 = vweird.f32 %v310
    %vm512 = vweird.f32 %v506
    %vm513 = vmor %vm511, %vm512
    %v514 = vsel %vm513, %v506, %v510
    %v515 = vand.u32 2147483647, %v310
    %vm516 = vcmp.eq.f32.partialorder %v515, 8.507059e+37
    %v517 = vand.u32 %v310, 2147483648
    %v518 = vor.u32 1.1754944e-38, %v517
    %v519 = vsel %vm516, %v518, %v514
    %v520 = vmul.f32 1.0, %v519
    %v521 = vrcp.pop %v322
    %v522 = vmul.f32 %v322, %v521
    %v523 = vsub.f32 1.0, %v522
    %v524 = vmul.f32 %v521, %v523
    %v525 = vadd.f32 %v521, %v524
    %vm526 = vweird.f32 %v322
    %vm527 = vweird.f32 %v521
    %vm528 = vmor %vm526, %vm527
    %v529 = vsel %vm528, %v521, %v525
    %v530 = vand.u32 2147483647, %v322
    %vm531 = vcmp.eq.f32.partialorder %v530, 8.507059e+37
    %v532 = vand.u32 %v322, 2147483648
    %v533 = vor.u32 1.1754944e-38, %v532
    %v534 = vsel %vm531, %v533, %v529
    %v535 = vmul.f32 1.0, %v534
    %v536 = vrcp.pop %v334
    %v537 = vmul.f32 %v334, %v536
    %v538 = vsub.f32 1.0, %v537
    %v539 = vmul.f32 %v536, %v538
    %v540 = vadd.f32 %v536, %v539
    %vm541 = vweird.f32 %v334
    %vm542 = vweird.f32 %v536
    %vm543 = vmor %vm541, %vm542
    %v544 = vsel %vm543, %v536, %v540
    %v545 = vand.u32 2147483647, %v334
    %vm546 = vcmp.eq.f32.partialorder %v545, 8.507059e+37
    %v547 = vand.u32 %v334, 2147483648
    %v548 = vor.u32 1.1754944e-38, %v547
    %v549 = vsel %vm546, %v548, %v544
    %v550 = vmul.f32 1.0, %v549
    %v551 = vrcp.pop %v346
    %v552 = vmul.f32 %v346, %v551
    %v553 = vsub.f32 1.0, %v552
    %v554 = vmul.f32 %v551, %v553
    %v555 = vadd.f32 %v551, %v554
    %vm556 = vweird.f32 %v346
    %vm557 = vweird.f32 %v551
    %vm558 = vmor %vm556, %vm557
    %v559 = vsel %vm558, %v551, %v555
    %v560 = vand.u32 2147483647, %v346
    %vm561 = vcmp.eq.f32.partialorder %v560, 8.507059e+37
    %v562 = vand.u32 %v346, 2147483648
    %v563 = vor.u32 1.1754944e-38, %v562
    %v564 = vsel %vm561, %v563, %v559
    %v565 = vmul.f32 1.0, %v564
    %v566 = vrcp.pop %v358
    %v567 = vmul.f32 %v358, %v566
    %v568 = vsub.f32 1.0, %v567
    %v569 = vmul.f32 %v566, %v568
    %v570 = vadd.f32 %v566, %v569
    %vm571 = vweird.f32 %v358
    %vm572 = vweird.f32 %v566
    %vm573 = vmor %vm571, %vm572
    %v574 = vsel %vm573, %v566, %v570
    %v575 = vand.u32 2147483647, %v358
    %vm576 = vcmp.eq.f32.partialorder %v575, 8.507059e+37
    %v577 = vand.u32 %v358, 2147483648
    %v578 = vor.u32 1.1754944e-38, %v577
    %v579 = vsel %vm576, %v578, %v574
    %v580 = vmul.f32 1.0, %v579
    %v581 = vrcp.pop %v370
    %v582 = vmul.f32 %v370, %v581
    %v583 = vsub.f32 1.0, %v582
    %v584 = vmul.f32 %v581, %v583
    %v585 = vadd.f32 %v581, %v584
    %vm586 = vweird.f32 %v370
    %vm587 = vweird.f32 %v581
    %vm588 = vmor %vm586, %vm587
    %v589 = vsel %vm588, %v581, %v585
    %v590 = vand.u32 2147483647, %v370
    %vm591 = vcmp.eq.f32.partialorder %v590, 8.507059e+37
    %v592 = vand.u32 %v370, 2147483648
    %v593 = vor.u32 1.1754944e-38, %v592
    %v594 = vsel %vm591, %v593, %v589
    %v595 = vmul.f32 1.0, %v594
    %v596 = vrcp.pop %v382
    %v597 = vmul.f32 %v382, %v596
    %v598 = vsub.f32 1.0, %v597
    %v599 = vmul.f32 %v596, %v598
    %v600 = vadd.f32 %v596, %v599
    %vm601 = vweird.f32 %v382
    %vm602 = vweird.f32 %v596
    %vm603 = vmor %vm601, %vm602
    %v604 = vsel %vm603, %v596, %v600
    %v605 = vand.u32 2147483647, %v382
    %vm606 = vcmp.eq.f32.partialorder %v605, 8.507059e+37
    %v607 = vand.u32 %v382, 2147483648
    %v608 = vor.u32 1.1754944e-38, %v607
    %v609 = vsel %vm606, %v608, %v604
    %v610 = vmul.f32 1.0, %v609
    %v611 = vrcp.pop %v394
    %v612 = vmul.f32 %v394, %v611
    %v613 = vsub.f32 1.0, %v612
    %v614 = vmul.f32 %v611, %v613
    %v615 = vadd.f32 %v611, %v614
    %vm616 = vweird.f32 %v394
    %vm617 = vweird.f32 %v611
    %vm618 = vmor %vm616, %vm617
    %v619 = vsel %vm618, %v611, %v615
    %v620 = vand.u32 2147483647, %v394
    %vm621 = vcmp.eq.f32.partialorder %v620, 8.507059e+37
    %v622 = vand.u32 %v394, 2147483648
    %v623 = vor.u32 1.1754944e-38, %v622
    %v624 = vsel %vm621, %v623, %v619
    %v625 = vmul.f32 1.0, %v624
    %v626 = vrcp.pop %v406
    %v627 = vmul.f32 %v406, %v626
    %v628 = vsub.f32 1.0, %v627
    %v629 = vmul.f32 %v626, %v628
    %v630 = vadd.f32 %v626, %v629
    %vm631 = vweird.f32 %v406
    %vm632 = vweird.f32 %v626
    %vm633 = vmor %vm631, %vm632
    %v634 = vsel %vm633, %v626, %v630
    %v635 = vand.u32 2147483647, %v406
    %vm636 = vcmp.eq.f32.partialorder %v635, 8.507059e+37
    %v637 = vand.u32 %v406, 2147483648
    %v638 = vor.u32 1.1754944e-38, %v637
    %v639 = vsel %vm636, %v638, %v634
    %v640 = vmul.f32 1.0, %v639
    %v641 = vrcp.pop %v418
    %v642 = vmul.f32 %v418, %v641
    %v643 = vsub.f32 1.0, %v642
    %v644 = vmul.f32 %v641, %v643
    %v645 = vadd.f32 %v641, %v644
    %vm646 = vweird.f32 %v418
    %vm647 = vweird.f32 %v641
    %vm648 = vmor %vm646, %vm647
    %v649 = vsel %vm648, %v641, %v645
    %v650 = vand.u32 2147483647, %v418
    %vm651 = vcmp.eq.f32.partialorder %v650, 8.507059e+37
    %v652 = vand.u32 %v418, 2147483648
    %v653 = vor.u32 1.1754944e-38, %v652
    %v654 = vsel %vm651, %v653, %v649
    %v655 = vmul.f32 1.0, %v654
    %v656 = vrcp.pop %v430
    %v657 = vmul.f32 %v430, %v656
    %v658 = vsub.f32 1.0, %v657
    %v659 = vmul.f32 %v656, %v658
    %v660 = vadd.f32 %v656, %v659
    %vm661 = vweird.f32 %v430
    %vm662 = vweird.f32 %v656
    %vm663 = vmor %vm661, %vm662
    %v664 = vsel %vm663, %v656, %v660
    %v665 = vand.u32 2147483647, %v430
    %vm666 = vcmp.eq.f32.partialorder %v665, 8.507059e+37
    %v667 = vand.u32 %v430, 2147483648
    %v668 = vor.u32 1.1754944e-38, %v667
    %v669 = vsel %vm666, %v668, %v664
    %v670 = vmul.f32 1.0, %v669
    %v671 = vsel %vm223, %v445, 0.0
    %v672 = vsel %vm224, %v460, 0.0
    %v673 = vsel %vm225, %v475, 0.0
    %v674 = vsel %vm226, %v490, 0.0
    %v675 = vsel %vm227, %v505, 0.0
    %v676 = vsel %vm228, %v520, 0.0
    %v677 = vsel %vm229, %v535, 0.0
    %v678 = vsel %vm230, %v550, 0.0
    %v679 = vsel %vm231, %v565, 0.0
    %v680 = vsel %vm232, %v580, 0.0
    %v681 = vsel %vm233, %v595, 0.0
    %v682 = vsel %vm234, %v610, 0.0
    %v683 = vsel %vm235, %v625, 0.0
    %v684 = vsel %vm236, %v640, 0.0
    %v685 = vsel %vm237, %v655, 0.0
    %v686 = vsel %vm238, %v670, 0.0
    %v687 = vmul.f32 %v62, %v671
    %v688 = vmul.f32 %v63, %v672
    %v689 = vmul.f32 %v64, %v673
    %v690 = vmul.f32 %v65, %v674
    %v691 = vmul.f32 %v66, %v675
    %v692 = vmul.f32 %v67, %v676
    %v693 = vmul.f32 %v68, %v677
    %v694 = vmul.f32 %v69, %v678
    %v695 = vmul.f32 %v70, %v679
    %v696 = vmul.f32 %v71, %v680
    %v697 = vmul.f32 %v72, %v681
    %v698 = vmul.f32 %v73, %v682
    %v699 = vmul.f32 %v74, %v683
    %v700 = vmul.f32 %v75, %v684
    %v701 = vmul.f32 %v76, %v685
    %v702 = vmul.f32 %v77, %v686
    %vm703 = vcmp.gt.f32.partialorder %v177, 0.0
    %vm704 = vcmp.gt.f32.partialorder %v180, 0.0
    %vm705 = vcmp.gt.f32.partialorder %v183, 0.0
    %vm706 = vcmp.gt.f32.partialorder %v186, 0.0
    %vm707 = vcmp.gt.f32.partialorder %v189, 0.0
    %vm708 = vcmp.gt.f32.partialorder %v192, 0.0
    %vm709 = vcmp.gt.f32.partialorder %v195, 0.0
    %vm710 = vcmp.gt.f32.partialorder %v198, 0.0
    %vm711 = vcmp.gt.f32.partialorder %v201, 0.0
    %vm712 = vcmp.gt.f32.partialorder %v204, 0.0
    %vm713 = vcmp.gt.f32.partialorder %v207, 0.0
    %vm714 = vcmp.gt.f32.partialorder %v210, 0.0
    %vm715 = vcmp.gt.f32.partialorder %v213, 0.0
    %vm716 = vcmp.gt.f32.partialorder %v216, 0.0
    %vm717 = vcmp.gt.f32.partialorder %v219, 0.0
    %vm718 = vcmp.gt.f32.partialorder %v222, 0.0
    %v719 = vrsqrt.pop %v177
    %v720 = vmul.f32 %v719, %v177
    %v721 = vmul.f32 %v720, %v719
    %v722 = vmul.f32 0.5, %v721
    %v723 = vsub.f32 1.5, %v722
    %v724 = vmul.f32 %v719, %v723
    %v725 = vmul.f32 %v177, %v724
    %vm726 = vcmp.eq.f32.partialorder %v177, inf
    %v727 = vsel %vm726, %v177, %v725
    %vm728 = vcmp.eq.f32.partialorder %v177, 0.0
    %v729 = vand.u32 %v177, 2147483648
    %v730 = vsel %vm728, %v729, %v727
    %v731 = vrsqrt.pop %v180
    %v732 = vmul.f32 %v731, %v180
    %v733 = vmul.f32 %v732, %v731
    %v734 = vmul.f32 0.5, %v733
    %v735 = vsub.f32 1.5, %v734
    %v736 = vmul.f32 %v731, %v735
    %v737 = vmul.f32 %v180, %v736
    %vm738 = vcmp.eq.f32.partialorder %v180, inf
    %v739 = vsel %vm738, %v180, %v737
    %vm740 = vcmp.eq.f32.partialorder %v180, 0.0
    %v741 = vand.u32 %v180, 2147483648
    %v742 = vsel %vm740, %v741, %v739
    %v743 = vrsqrt.pop %v183
    %v744 = vmul.f32 %v743, %v183
    %v745 = vmul.f32 %v744, %v743
    %v746 = vmul.f32 0.5, %v745
    %v747 = vsub.f32 1.5, %v746
    %v748 = vmul.f32 %v743, %v747
    %v749 = vmul.f32 %v183, %v748
    %vm750 = vcmp.eq.f32.partialorder %v183, inf
    %v751 = vsel %vm750, %v183, %v749
    %vm752 = vcmp.eq.f32.partialorder %v183, 0.0
    %v753 = vand.u32 %v183, 2147483648
    %v754 = vsel %vm752, %v753, %v751
    %v755 = vrsqrt.pop %v186
    %v756 = vmul.f32 %v755, %v186
    %v757 = vmul.f32 %v756, %v755
    %v758 = vmul.f32 0.5, %v757
    %v759 = vsub.f32 1.5, %v758
    %v760 = vmul.f32 %v755, %v759
    %v761 = vmul.f32 %v186, %v760
    %vm762 = vcmp.eq.f32.partialorder %v186, inf
    %v763 = vsel %vm762, %v186, %v761
    %vm764 = vcmp.eq.f32.partialorder %v186, 0.0
    %v765 = vand.u32 %v186, 2147483648
    %v766 = vsel %vm764, %v765, %v763
    %v767 = vrsqrt.pop %v189
    %v768 = vmul.f32 %v767, %v189
    %v769 = vmul.f32 %v768, %v767
    %v770 = vmul.f32 0.5, %v769
    %v771 = vsub.f32 1.5, %v770
    %v772 = vmul.f32 %v767, %v771
    %v773 = vmul.f32 %v189, %v772
    %vm774 = vcmp.eq.f32.partialorder %v189, inf
    %v775 = vsel %vm774, %v189, %v773
    %vm776 = vcmp.eq.f32.partialorder %v189, 0.0
    %v777 = vand.u32 %v189, 2147483648
    %v778 = vsel %vm776, %v777, %v775
    %v779 = vrsqrt.pop %v192
    %v780 = vmul.f32 %v779, %v192
    %v781 = vmul.f32 %v780, %v779
    %v782 = vmul.f32 0.5, %v781
    %v783 = vsub.f32 1.5, %v782
    %v784 = vmul.f32 %v779, %v783
    %v785 = vmul.f32 %v192, %v784
    %vm786 = vcmp.eq.f32.partialorder %v192, inf
    %v787 = vsel %vm786, %v192, %v785
    %vm788 = vcmp.eq.f32.partialorder %v192, 0.0
    %v789 = vand.u32 %v192, 2147483648
    %v790 = vsel %vm788, %v789, %v787
    %v791 = vrsqrt.pop %v195
    %v792 = vmul.f32 %v791, %v195
    %v793 = vmul.f32 %v792, %v791
    %v794 = vmul.f32 0.5, %v793
    %v795 = vsub.f32 1.5, %v794
    %v796 = vmul.f32 %v791, %v795
    %v797 = vmul.f32 %v195, %v796
    %vm798 = vcmp.eq.f32.partialorder %v195, inf
    %v799 = vsel %vm798, %v195, %v797
    %vm800 = vcmp.eq.f32.partialorder %v195, 0.0
    %v801 = vand.u32 %v195, 2147483648
    %v802 = vsel %vm800, %v801, %v799
    %v803 = vrsqrt.pop %v198
    %v804 = vmul.f32 %v803, %v198
    %v805 = vmul.f32 %v804, %v803
    %v806 = vmul.f32 0.5, %v805
    %v807 = vsub.f32 1.5, %v806
    %v808 = vmul.f32 %v803, %v807
    %v809 = vmul.f32 %v198, %v808
    %vm810 = vcmp.eq.f32.partialorder %v198, inf
    %v811 = vsel %vm810, %v198, %v809
    %vm812 = vcmp.eq.f32.partialorder %v198, 0.0
    %v813 = vand.u32 %v198, 2147483648
    %v814 = vsel %vm812, %v813, %v811
    %v815 = vrsqrt.pop %v201
    %v816 = vmul.f32 %v815, %v201
    %v817 = vmul.f32 %v816, %v815
    %v818 = vmul.f32 0.5, %v817
    %v819 = vsub.f32 1.5, %v818
    %v820 = vmul.f32 %v815, %v819
    %v821 = vmul.f32 %v201, %v820
    %vm822 = vcmp.eq.f32.partialorder %v201, inf
    %v823 = vsel %vm822, %v201, %v821
    %vm824 = vcmp.eq.f32.partialorder %v201, 0.0
    %v825 = vand.u32 %v201, 2147483648
    %v826 = vsel %vm824, %v825, %v823
    %v827 = vrsqrt.pop %v204
    %v828 = vmul.f32 %v827, %v204
    %v829 = vmul.f32 %v828, %v827
    %v830 = vmul.f32 0.5, %v829
    %v831 = vsub.f32 1.5, %v830
    %v832 = vmul.f32 %v827, %v831
    %v833 = vmul.f32 %v204, %v832
    %vm834 = vcmp.eq.f32.partialorder %v204, inf
    %v835 = vsel %vm834, %v204, %v833
    %vm836 = vcmp.eq.f32.partialorder %v204, 0.0
    %v837 = vand.u32 %v204, 2147483648
    %v838 = vsel %vm836, %v837, %v835
    %v839 = vrsqrt.pop %v207
    %v840 = vmul.f32 %v839, %v207
    %v841 = vmul.f32 %v840, %v839
    %v842 = vmul.f32 0.5, %v841
    %v843 = vsub.f32 1.5, %v842
    %v844 = vmul.f32 %v839, %v843
    %v845 = vmul.f32 %v207, %v844
    %vm846 = vcmp.eq.f32.partialorder %v207, inf
    %v847 = vsel %vm846, %v207, %v845
    %vm848 = vcmp.eq.f32.partialorder %v207, 0.0
    %v849 = vand.u32 %v207, 2147483648
    %v850 = vsel %vm848, %v849, %v847
    %v851 = vrsqrt.pop %v210
    %v852 = vmul.f32 %v851, %v210
    %v853 = vmul.f32 %v852, %v851
    %v854 = vmul.f32 0.5, %v853
    %v855 = vsub.f32 1.5, %v854
    %v856 = vmul.f32 %v851, %v855
    %v857 = vmul.f32 %v210, %v856
    %vm858 = vcmp.eq.f32.partialorder %v210, inf
    %v859 = vsel %vm858, %v210, %v857
    %vm860 = vcmp.eq.f32.partialorder %v210, 0.0
    %v861 = vand.u32 %v210, 2147483648
    %v862 = vsel %vm860, %v861, %v859
    %v863 = vrsqrt.pop %v213
    %v864 = vmul.f32 %v863, %v213
    %v865 = vmul.f32 %v864, %v863
    %v866 = vmul.f32 0.5, %v865
    %v867 = vsub.f32 1.5, %v866
    %v868 = vmul.f32 %v863, %v867
    %v869 = vmul.f32 %v213, %v868
    %vm870 = vcmp.eq.f32.partialorder %v213, inf
    %v871 = vsel %vm870, %v213, %v869
    %vm872 = vcmp.eq.f32.partialorder %v213, 0.0
    %v873 = vand.u32 %v213, 2147483648
    %v874 = vsel %vm872, %v873, %v871
    %v875 = vrsqrt.pop %v216
    %v876 = vmul.f32 %v875, %v216
    %v877 = vmul.f32 %v876, %v875
    %v878 = vmul.f32 0.5, %v877
    %v879 = vsub.f32 1.5, %v878
    %v880 = vmul.f32 %v875, %v879
    %v881 = vmul.f32 %v216, %v880
    %vm882 = vcmp.eq.f32.partialorder %v216, inf
    %v883 = vsel %vm882, %v216, %v881
    %vm884 = vcmp.eq.f32.partialorder %v216, 0.0
    %v885 = vand.u32 %v216, 2147483648
    %v886 = vsel %vm884, %v885, %v883
    %v887 = vrsqrt.pop %v219
    %v888 = vmul.f32 %v887, %v219
    %v889 = vmul.f32 %v888, %v887
    %v890 = vmul.f32 0.5, %v889
    %v891 = vsub.f32 1.5, %v890
    %v892 = vmul.f32 %v887, %v891
    %v893 = vmul.f32 %v219, %v892
    %vm894 = vcmp.eq.f32.partialorder %v219, inf
    %v895 = vsel %vm894, %v219, %v893
    %vm896 = vcmp.eq.f32.partialorder %v219, 0.0
    %v897 = vand.u32 %v219, 2147483648
    %v898 = vsel %vm896, %v897, %v895
    %v899 = vrsqrt.pop %v222
    %v900 = vmul.f32 %v899, %v222
    %v901 = vmul.f32 %v900, %v899
    %v902 = vmul.f32 0.5, %v901
    %v903 = vsub.f32 1.5, %v902
    %v904 = vmul.f32 %v899, %v903
    %v905 = vmul.f32 %v222, %v904
    %vm906 = vcmp.eq.f32.partialorder %v222, inf
    %v907 = vsel %vm906, %v222, %v905
    %vm908 = vcmp.eq.f32.partialorder %v222, 0.0
    %v909 = vand.u32 %v222, 2147483648
    %v910 = vsel %vm908, %v909, %v907
    %v911 = vrcp.pop %v730
    %v912 = vmul.f32 %v730, %v911
    %v913 = vsub.f32 1.0, %v912
    %v914 = vmul.f32 %v911, %v913
    %v915 = vadd.f32 %v911, %v914
    %vm916 = vweird.f32 %v730
    %vm917 = vweird.f32 %v911
    %vm918 = vmor %vm916, %vm917
    %v919 = vsel %vm918, %v911, %v915
    %v920 = vand.u32 2147483647, %v730
    %vm921 = vcmp.eq.f32.partialorder %v920, 8.507059e+37
    %v922 = vand.u32 %v730, 2147483648
    %v923 = vor.u32 1.1754944e-38, %v922
    %v924 = vsel %vm921, %v923, %v919
    %v925 = vmul.f32 1.0, %v924
    %v926 = vrcp.pop %v742
    %v927 = vmul.f32 %v742, %v926
    %v928 = vsub.f32 1.0, %v927
    %v929 = vmul.f32 %v926, %v928
    %v930 = vadd.f32 %v926, %v929
    %vm931 = vweird.f32 %v742
    %vm932 = vweird.f32 %v926
    %vm933 = vmor %vm931, %vm932
    %v934 = vsel %vm933, %v926, %v930
    %v935 = vand.u32 2147483647, %v742
    %vm936 = vcmp.eq.f32.partialorder %v935, 8.507059e+37
    %v937 = vand.u32 %v742, 2147483648
    %v938 = vor.u32 1.1754944e-38, %v937
    %v939 = vsel %vm936, %v938, %v934
    %v940 = vmul.f32 1.0, %v939
    %v941 = vrcp.pop %v754
    %v942 = vmul.f32 %v754, %v941
    %v943 = vsub.f32 1.0, %v942
    %v944 = vmul.f32 %v941, %v943
    %v945 = vadd.f32 %v941, %v944
    %vm946 = vweird.f32 %v754
    %vm947 = vweird.f32 %v941
    %vm948 = vmor %vm946, %vm947
    %v949 = vsel %vm948, %v941, %v945
    %v950 = vand.u32 2147483647, %v754
    %vm951 = vcmp.eq.f32.partialorder %v950, 8.507059e+37
    %v952 = vand.u32 %v754, 2147483648
    %v953 = vor.u32 1.1754944e-38, %v952
    %v954 = vsel %vm951, %v953, %v949
    %v955 = vmul.f32 1.0, %v954
    %v956 = vrcp.pop %v766
    %v957 = vmul.f32 %v766, %v956
    %v958 = vsub.f32 1.0, %v957
    %v959 = vmul.f32 %v956, %v958
    %v960 = vadd.f32 %v956, %v959
    %vm961 = vweird.f32 %v766
    %vm962 = vweird.f32 %v956
    %vm963 = vmor %vm961, %vm962
    %v964 = vsel %vm963, %v956, %v960
    %v965 = vand.u32 2147483647, %v766
    %vm966 = vcmp.eq.f32.partialorder %v965, 8.507059e+37
    %v967 = vand.u32 %v766, 2147483648
    %v968 = vor.u32 1.1754944e-38, %v967
    %v969 = vsel %vm966, %v968, %v964
    %v970 = vmul.f32 1.0, %v969
    %v971 = vrcp.pop %v778
    %v972 = vmul.f32 %v778, %v971
    %v973 = vsub.f32 1.0, %v972
    %v974 = vmul.f32 %v971, %v973
    %v975 = vadd.f32 %v971, %v974
    %vm976 = vweird.f32 %v778
    %vm977 = vweird.f32 %v971
    %vm978 = vmor %vm976, %vm977
    %v979 = vsel %vm978, %v971, %v975
    %v980 = vand.u32 2147483647, %v778
    %vm981 = vcmp.eq.f32.partialorder %v980, 8.507059e+37
    %v982 = vand.u32 %v778, 2147483648
    %v983 = vor.u32 1.1754944e-38, %v982
    %v984 = vsel %vm981, %v983, %v979
    %v985 = vmul.f32 1.0, %v984
    %v986 = vrcp.pop %v790
    %v987 = vmul.f32 %v790, %v986
    %v988 = vsub.f32 1.0, %v987
    %v989 = vmul.f32 %v986, %v988
    %v990 = vadd.f32 %v986, %v989
    %vm991 = vweird.f32 %v790
    %vm992 = vweird.f32 %v986
    %vm993 = vmor %vm991, %vm992
    %v994 = vsel %vm993, %v986, %v990
    %v995 = vand.u32 2147483647, %v790
    %vm996 = vcmp.eq.f32.partialorder %v995, 8.507059e+37
    %v997 = vand.u32 %v790, 2147483648
    %v998 = vor.u32 1.1754944e-38, %v997
    %v999 = vsel %vm996, %v998, %v994
    %v1000 = vmul.f32 1.0, %v999
    %v1001 = vrcp.pop %v802
    %v1002 = vmul.f32 %v802, %v1001
    %v1003 = vsub.f32 1.0, %v1002
    %v1004 = vmul.f32 %v1001, %v1003
    %v1005 = vadd.f32 %v1001, %v1004
    %vm1006 = vweird.f32 %v802
    %vm1007 = vweird.f32 %v1001
    %vm1008 = vmor %vm1006, %vm1007
    %v1009 = vsel %vm1008, %v1001, %v1005
    %v1010 = vand.u32 2147483647, %v802
    %vm1011 = vcmp.eq.f32.partialorder %v1010, 8.507059e+37
    %v1012 = vand.u32 %v802, 2147483648
    %v1013 = vor.u32 1.1754944e-38, %v1012
    %v1014 = vsel %vm1011, %v1013, %v1009
    %v1015 = vmul.f32 1.0, %v1014
    %v1016 = vrcp.pop %v814
    %v1017 = vmul.f32 %v814, %v1016
    %v1018 = vsub.f32 1.0, %v1017
    %v1019 = vmul.f32 %v1016, %v1018
    %v1020 = vadd.f32 %v1016, %v1019
    %vm1021 = vweird.f32 %v814
    %vm1022 = vweird.f32 %v1016
    %vm1023 = vmor %vm1021, %vm1022
    %v1024 = vsel %vm1023, %v1016, %v1020
    %v1025 = vand.u32 2147483647, %v814
    %vm1026 = vcmp.eq.f32.partialorder %v1025, 8.507059e+37
    %v1027 = vand.u32 %v814, 2147483648
    %v1028 = vor.u32 1.1754944e-38, %v1027
    %v1029 = vsel %vm1026, %v1028, %v1024
    %v1030 = vmul.f32 1.0, %v1029
    %v1031 = vrcp.pop %v826
    %v1032 = vmul.f32 %v826, %v1031
    %v1033 = vsub.f32 1.0, %v1032
    %v1034 = vmul.f32 %v1031, %v1033
    %v1035 = vadd.f32 %v1031, %v1034
    %vm1036 = vweird.f32 %v826
    %vm1037 = vweird.f32 %v1031
    %vm1038 = vmor %vm1036, %vm1037
    %v1039 = vsel %vm1038, %v1031, %v1035
    %v1040 = vand.u32 2147483647, %v826
    %vm1041 = vcmp.eq.f32.partialorder %v1040, 8.507059e+37
    %v1042 = vand.u32 %v826, 2147483648
    %v1043 = vor.u32 1.1754944e-38, %v1042
    %v1044 = vsel %vm1041, %v1043, %v1039
    %v1045 = vmul.f32 1.0, %v1044
    %v1046 = vrcp.pop %v838
    %v1047 = vmul.f32 %v838, %v1046
    %v1048 = vsub.f32 1.0, %v1047
    %v1049 = vmul.f32 %v1046, %v1048
    %v1050 = vadd.f32 %v1046, %v1049
    %vm1051 = vweird.f32 %v838
    %vm1052 = vweird.f32 %v1046
    %vm1053 = vmor %vm1051, %vm1052
    %v1054 = vsel %vm1053, %v1046, %v1050
    %v1055 = vand.u32 2147483647, %v838
    %vm1056 = vcmp.eq.f32.partialorder %v1055, 8.507059e+37
    %v1057 = vand.u32 %v838, 2147483648
    %v1058 = vor.u32 1.1754944e-38, %v1057
    %v1059 = vsel %vm1056, %v1058, %v1054
    %v1060 = vmul.f32 1.0, %v1059
    %v1061 = vrcp.pop %v850
    %v1062 = vmul.f32 %v850, %v1061
    %v1063 = vsub.f32 1.0, %v1062
    %v1064 = vmul.f32 %v1061, %v1063
    %v1065 = vadd.f32 %v1061, %v1064
    %vm1066 = vweird.f32 %v850
    %vm1067 = vweird.f32 %v1061
    %vm1068 = vmor %vm1066, %vm1067
    %v1069 = vsel %vm1068, %v1061, %v1065
    %v1070 = vand.u32 2147483647, %v850
    %vm1071 = vcmp.eq.f32.partialorder %v1070, 8.507059e+37
    %v1072 = vand.u32 %v850, 2147483648
    %v1073 = vor.u32 1.1754944e-38, %v1072
    %v1074 = vsel %vm1071, %v1073, %v1069
    %v1075 = vmul.f32 1.0, %v1074
    %v1076 = vrcp.pop %v862
    %v1077 = vmul.f32 %v862, %v1076
    %v1078 = vsub.f32 1.0, %v1077
    %v1079 = vmul.f32 %v1076, %v1078
    %v1080 = vadd.f32 %v1076, %v1079
    %vm1081 = vweird.f32 %v862
    %vm1082 = vweird.f32 %v1076
    %vm1083 = vmor %vm1081, %vm1082
    %v1084 = vsel %vm1083, %v1076, %v1080
    %v1085 = vand.u32 2147483647, %v862
    %vm1086 = vcmp.eq.f32.partialorder %v1085, 8.507059e+37
    %v1087 = vand.u32 %v862, 2147483648
    %v1088 = vor.u32 1.1754944e-38, %v1087
    %v1089 = vsel %vm1086, %v1088, %v1084
    %v1090 = vmul.f32 1.0, %v1089
    %v1091 = vrcp.pop %v874
    %v1092 = vmul.f32 %v874, %v1091
    %v1093 = vsub.f32 1.0, %v1092
    %v1094 = vmul.f32 %v1091, %v1093
    %v1095 = vadd.f32 %v1091, %v1094
    %vm1096 = vweird.f32 %v874
    %vm1097 = vweird.f32 %v1091
    %vm1098 = vmor %vm1096, %vm1097
    %v1099 = vsel %vm1098, %v1091, %v1095
    %v1100 = vand.u32 2147483647, %v874
    %vm1101 = vcmp.eq.f32.partialorder %v1100, 8.507059e+37
    %v1102 = vand.u32 %v874, 2147483648
    %v1103 = vor.u32 1.1754944e-38, %v1102
    %v1104 = vsel %vm1101, %v1103, %v1099
    %v1105 = vmul.f32 1.0, %v1104
    %v1106 = vrcp.pop %v886
    %v1107 = vmul.f32 %v886, %v1106
    %v1108 = vsub.f32 1.0, %v1107
    %v1109 = vmul.f32 %v1106, %v1108
    %v1110 = vadd.f32 %v1106, %v1109
    %vm1111 = vweird.f32 %v886
    %vm1112 = vweird.f32 %v1106
    %vm1113 = vmor %vm1111, %vm1112
    %v1114 = vsel %vm1113, %v1106, %v1110
    %v1115 = vand.u32 2147483647, %v886
    %vm1116 = vcmp.eq.f32.partialorder %v1115, 8.507059e+37
    %v1117 = vand.u32 %v886, 2147483648
    %v1118 = vor.u32 1.1754944e-38, %v1117
    %v1119 = vsel %vm1116, %v1118, %v1114
    %v1120 = vmul.f32 1.0, %v1119
    %v1121 = vrcp.pop %v898
    %v1122 = vmul.f32 %v898, %v1121
    %v1123 = vsub.f32 1.0, %v1122
    %v1124 = vmul.f32 %v1121, %v1123
    %v1125 = vadd.f32 %v1121, %v1124
    %vm1126 = vweird.f32 %v898
    %vm1127 = vweird.f32 %v1121
    %vm1128 = vmor %vm1126, %vm1127
    %v1129 = vsel %vm1128, %v1121, %v1125
    %v1130 = vand.u32 2147483647, %v898
    %vm1131 = vcmp.eq.f32.partialorder %v1130, 8.507059e+37
    %v1132 = vand.u32 %v898, 2147483648
    %v1133 = vor.u32 1.1754944e-38, %v1132
    %v1134 = vsel %vm1131, %v1133, %v1129
    %v1135 = vmul.f32 1.0, %v1134
    %v1136 = vrcp.pop %v910
    %v1137 = vmul.f32 %v910, %v1136
    %v1138 = vsub.f32 1.0, %v1137
    %v1139 = vmul.f32 %v1136, %v1138
    %v1140 = vadd.f32 %v1136, %v1139
    %vm1141 = vweird.f32 %v910
    %vm1142 = vweird.f32 %v1136
    %vm1143 = vmor %vm1141, %vm1142
    %v1144 = vsel %vm1143, %v1136, %v1140
    %v1145 = vand.u32 2147483647, %v910
    %vm1146 = vcmp.eq.f32.partialorder %v1145, 8.507059e+37
    %v1147 = vand.u32 %v910, 2147483648
    %v1148 = vor.u32 1.1754944e-38, %v1147
    %v1149 = vsel %vm1146, %v1148, %v1144
    %v1150 = vmul.f32 1.0, %v1149
    %v1151 = vsel %vm703, %v925, 0.0
    %v1152 = vsel %vm704, %v940, 0.0
    %v1153 = vsel %vm705, %v955, 0.0
    %v1154 = vsel %vm706, %v970, 0.0
    %v1155 = vsel %vm707, %v985, 0.0
    %v1156 = vsel %vm708, %v1000, 0.0
    %v1157 = vsel %vm709, %v1015, 0.0
    %v1158 = vsel %vm710, %v1030, 0.0
    %v1159 = vsel %vm711, %v1045, 0.0
    %v1160 = vsel %vm712, %v1060, 0.0
    %v1161 = vsel %vm713, %v1075, 0.0
    %v1162 = vsel %vm714, %v1090, 0.0
    %v1163 = vsel %vm715, %v1105, 0.0
    %v1164 = vsel %vm716, %v1120, 0.0
    %v1165 = vsel %vm717, %v1135, 0.0
    %v1166 = vsel %vm718, %v1150, 0.0
    %v1167 = vmul.f32 %v78, %v1151
    %v1168 = vmul.f32 %v79, %v1152
    %v1169 = vmul.f32 %v80, %v1153
    %v1170 = vmul.f32 %v81, %v1154
    %v1171 = vmul.f32 %v82, %v1155
    %v1172 = vmul.f32 %v83, %v1156
    %v1173 = vmul.f32 %v84, %v1157
    %v1174 = vmul.f32 %v85, %v1158
    %v1175 = vmul.f32 %v86, %v1159
    %v1176 = vmul.f32 %v87, %v1160
    %v1177 = vmul.f32 %v88, %v1161
    %v1178 = vmul.f32 %v89, %v1162
    %v1179 = vmul.f32 %v90, %v1163
    %v1180 = vmul.f32 %v91, %v1164
    %v1181 = vmul.f32 %v92, %v1165
    %v1182 = vmul.f32 %v93, %v1166
    %v1184 = vsel %vm110, %v687, 0
    %v1187 = vsel %vm110, %v688, 0
    %v1190 = vsel %vm110, %v689, 0
    %v1193 = vsel %vm110, %v690, 0
    %v1196 = vsel %vm110, %v691, 0
    %v1199 = vsel %vm110, %v692, 0
    %v1202 = vsel %vm110, %v693, 0
    %v1205 = vsel %vm110, %v694, 0
    %v1208 = vsel %vm110, %v695, 0
    %v1211 = vsel %vm110, %v696, 0
    %v1214 = vsel %vm110, %v697, 0
    %v1217 = vsel %vm110, %v698, 0
    %v1220 = vsel %vm110, %v699, 0
    %v1223 = vsel %vm110, %v700, 0
    %v1226 = vsel %vm110, %v701, 0
    %v1229 = vsel %vm110, %v702, 0
    %v1232 = vsel %vm110, %v1167, 0
    %v1235 = vsel %vm110, %v1168, 0
    %v1238 = vsel %vm110, %v1169, 0
    %v1241 = vsel %vm110, %v1170, 0
    %v1244 = vsel %vm110, %v1171, 0
    %v1247 = vsel %vm110, %v1172, 0
    %v1250 = vsel %vm110, %v1173, 0
    %v1253 = vsel %vm110, %v1174, 0
    %v1256 = vsel %vm110, %v1175, 0
    %v1259 = vsel %vm110, %v1176, 0
    %v1262 = vsel %vm110, %v1177, 0
    %v1265 = vsel %vm110, %v1178, 0
    %v1268 = vsel %vm110, %v1179, 0
    %v1271 = vsel %vm110, %v1180, 0
    %v1274 = vsel %vm110, %v1181, 0
    %v1277 = vsel %vm110, %v1182, 0
    %1279 = vmatpush.xpose.msra.mxu0 %v1277
    %1280 = vmatpush.xpose.msra.mxu0 %v1274
    %1281 = vmatpush.xpose.msra.mxu0 %v1271
    %1282 = vmatpush.xpose.msra.mxu0 %v1268
    %1283 = vmatpush.xpose.msra.mxu0 %v1265
    %1284 = vmatpush.xpose.msra.mxu0 %v1262
    %1285 = vmatpush.xpose.msra.mxu0 %v1259
    %1286 = vmatpush.xpose.msra.mxu0 %v1256
    %1287 = vmatpush.xpose.msra.mxu0 %v1253
    %1288 = vmatpush.xpose.msra.mxu0 %v1250
    %1289 = vmatpush.xpose.msra.mxu0 %v1247
    %1290 = vmatpush.xpose.msra.mxu0 %v1244
    %1291 = vmatpush.xpose.msra.mxu0 %v1241
    %1292 = vmatpush.xpose.msra.mxu0 %v1238
    %1293 = vmatpush.xpose.msra.mxu0 %v1235
    %1294 = vmatpush.xpose.msra.mxu0 %v1232
    %1295 = vmatmul.f32.gmra.mxu0 %v1184
    %v1296 = vpop.f32.mrf.mxu0
    %v1297 = vadd.f32 0.0, %v1296
    %1298 = vmatmul.f32.gmra.mxu0 %v1187
    %v1299 = vpop.f32.mrf.mxu0
    %v1300 = vadd.f32 0.0, %v1299
    %1301 = vmatmul.f32.gmra.mxu0 %v1190
    %v1302 = vpop.f32.mrf.mxu0
    %v1303 = vadd.f32 0.0, %v1302
    %1304 = vmatmul.f32.gmra.mxu0 %v1193
    %v1305 = vpop.f32.mrf.mxu0
    %v1306 = vadd.f32 0.0, %v1305
    %1307 = vmatmul.f32.gmra.mxu0 %v1196
    %v1308 = vpop.f32.mrf.mxu0
    %v1309 = vadd.f32 0.0, %v1308
    %1310 = vmatmul.f32.gmra.mxu0 %v1199
    %v1311 = vpop.f32.mrf.mxu0
    %v1312 = vadd.f32 0.0, %v1311
    %1313 = vmatmul.f32.gmra.mxu0 %v1202
    %v1314 = vpop.f32.mrf.mxu0
    %v1315 = vadd.f32 0.0, %v1314
    %1316 = vmatmul.f32.gmra.mxu0 %v1205
    %v1317 = vpop.f32.mrf.mxu0
    %v1318 = vadd.f32 0.0, %v1317
    %1319 = vmatmul.f32.gmra.mxu0 %v1208
    %v1320 = vpop.f32.mrf.mxu0
    %v1321 = vadd.f32 0.0, %v1320
    %1322 = vmatmul.f32.gmra.mxu0 %v1211
    %v1323 = vpop.f32.mrf.mxu0
    %v1324 = vadd.f32 0.0, %v1323
    %1325 = vmatmul.f32.gmra.mxu0 %v1214
    %v1326 = vpop.f32.mrf.mxu0
    %v1327 = vadd.f32 0.0, %v1326
    %1328 = vmatmul.f32.gmra.mxu0 %v1217
    %v1329 = vpop.f32.mrf.mxu0
    %v1330 = vadd.f32 0.0, %v1329
    %1331 = vmatmul.f32.gmra.mxu0 %v1220
    %v1332 = vpop.f32.mrf.mxu0
    %v1333 = vadd.f32 0.0, %v1332
    %1334 = vmatmul.f32.gmra.mxu0 %v1223
    %v1335 = vpop.f32.mrf.mxu0
    %v1336 = vadd.f32 0.0, %v1335
    %1337 = vmatmul.f32.gmra.mxu0 %v1226
    %v1338 = vpop.f32.mrf.mxu0
    %v1339 = vadd.f32 0.0, %v1338
    %1340 = vmatmul.f32.gmra.mxu0 %v1229
    %v1341 = vpop.f32.mrf.mxu0
    %v1342 = vadd.f32 0.0, %v1341
    %1343 = vdwg.mxu0
    %v1344 = vld [vmem:[%s2] sm:$0xff]
    %v1345 = vld [vmem:[%s2 + $0x8] sm:$0xff]
    %v1346 = vld [vmem:[%s2 + $0x10] sm:$0xff]
    %v1347 = vld [vmem:[%s2 + $0x18] sm:$0xff]
    %v1348 = vld [vmem:[%s2 + $0x20] sm:$0xff]
    %v1349 = vld [vmem:[%s2 + $0x28] sm:$0xff]
    %v1350 = vld [vmem:[%s2 + $0x30] sm:$0xff]
    %v1351 = vld [vmem:[%s2 + $0x38] sm:$0xff]
    %v1352 = vld [vmem:[%s2 + $0x40] sm:$0xff]
    %v1353 = vld [vmem:[%s2 + $0x48] sm:$0xff]
    %v1354 = vld [vmem:[%s2 + $0x50] sm:$0xff]
    %v1355 = vld [vmem:[%s2 + $0x58] sm:$0xff]
    %v1356 = vld [vmem:[%s2 + $0x60] sm:$0xff]
    %v1357 = vld [vmem:[%s2 + $0x68] sm:$0xff]
    %v1358 = vld [vmem:[%s2 + $0x70] sm:$0xff]
    %v1359 = vld [vmem:[%s2 + $0x78] sm:$0xff]
    %v1360 = vld [vmem:[%s3] sm:$0x1]
    %1361 = vset.pattern.permute.xlu0 0
    %1362 = vperm.xlu0 %1361, %v1344
    %v1363 = vpop.permute.xlu0 %1362
    %1364 = vset.pattern.permute.xlu0 0
    %1365 = vperm.xlu0 %1364, %v1345
    %v1366 = vpop.permute.xlu0 %1365
    %1367 = vset.pattern.permute.xlu0 0
    %1368 = vperm.xlu0 %1367, %v1346
    %v1369 = vpop.permute.xlu0 %1368
    %1370 = vset.pattern.permute.xlu0 0
    %1371 = vperm.xlu0 %1370, %v1347
    %v1372 = vpop.permute.xlu0 %1371
    %1373 = vset.pattern.permute.xlu0 0
    %1374 = vperm.xlu0 %1373, %v1348
    %v1375 = vpop.permute.xlu0 %1374
    %1376 = vset.pattern.permute.xlu0 0
    %1377 = vperm.xlu0 %1376, %v1349
    %v1378 = vpop.permute.xlu0 %1377
    %1379 = vset.pattern.permute.xlu0 0
    %1380 = vperm.xlu0 %1379, %v1350
    %v1381 = vpop.permute.xlu0 %1380
    %1382 = vset.pattern.permute.xlu0 0
    %1383 = vperm.xlu0 %1382, %v1351
    %v1384 = vpop.permute.xlu0 %1383
    %1385 = vset.pattern.permute.xlu0 0
    %1386 = vperm.xlu0 %1385, %v1352
    %v1387 = vpop.permute.xlu0 %1386
    %1388 = vset.pattern.permute.xlu0 0
    %1389 = vperm.xlu0 %1388, %v1353
    %v1390 = vpop.permute.xlu0 %1389
    %1391 = vset.pattern.permute.xlu0 0
    %1392 = vperm.xlu0 %1391, %v1354
    %v1393 = vpop.permute.xlu0 %1392
    %1394 = vset.pattern.permute.xlu0 0
    %1395 = vperm.xlu0 %1394, %v1355
    %v1396 = vpop.permute.xlu0 %1395
    %1397 = vset.pattern.permute.xlu0 0
    %1398 = vperm.xlu0 %1397, %v1356
    %v1399 = vpop.permute.xlu0 %1398
    %1400 = vset.pattern.permute.xlu0 0
    %1401 = vperm.xlu0 %1400, %v1357
    %v1402 = vpop.permute.xlu0 %1401
    %1403 = vset.pattern.permute.xlu0 0
    %1404 = vperm.xlu0 %1403, %v1358
    %v1405 = vpop.permute.xlu0 %1404
    %1406 = vset.pattern.permute.xlu0 0
    %1407 = vperm.xlu0 %1406, %v1359
    %v1408 = vpop.permute.xlu0 %1407
    %v1409 = vperm.slane %v1360, 0
    %vm1410 = vcmp.eq.s32.totalorder %v1363, %v1409
    %vm1411 = vcmp.eq.s32.totalorder %v1366, %v1409
    %vm1412 = vcmp.eq.s32.totalorder %v1369, %v1409
    %vm1413 = vcmp.eq.s32.totalorder %v1372, %v1409
    %vm1414 = vcmp.eq.s32.totalorder %v1375, %v1409
    %vm1415 = vcmp.eq.s32.totalorder %v1378, %v1409
    %vm1416 = vcmp.eq.s32.totalorder %v1381, %v1409
    %vm1417 = vcmp.eq.s32.totalorder %v1384, %v1409
    %vm1418 = vcmp.eq.s32.totalorder %v1387, %v1409
    %vm1419 = vcmp.eq.s32.totalorder %v1390, %v1409
    %vm1420 = vcmp.eq.s32.totalorder %v1393, %v1409
    %vm1421 = vcmp.eq.s32.totalorder %v1396, %v1409
    %vm1422 = vcmp.eq.s32.totalorder %v1399, %v1409
    %vm1423 = vcmp.eq.s32.totalorder %v1402, %v1409
    %vm1424 = vcmp.eq.s32.totalorder %v1405, %v1409
    %vm1425 = vcmp.eq.s32.totalorder %v1408, %v1409
    %v1426 = vsel %vm1410, 1, 0
    %v1427 = vsel %vm1411, 1, 0
    %v1428 = vsel %vm1412, 1, 0
    %v1429 = vsel %vm1413, 1, 0
    %v1430 = vsel %vm1414, 1, 0
    %v1431 = vsel %vm1415, 1, 0
    %v1432 = vsel %vm1416, 1, 0
    %v1433 = vsel %vm1417, 1, 0
    %v1434 = vsel %vm1418, 1, 0
    %v1435 = vsel %vm1419, 1, 0
    %v1436 = vsel %vm1420, 1, 0
    %v1437 = vsel %vm1421, 1, 0
    %v1438 = vsel %vm1422, 1, 0
    %v1439 = vsel %vm1423, 1, 0
    %v1440 = vsel %vm1424, 1, 0
    %v1441 = vsel %vm1425, 1, 0
    %v1442 = vcvt.s32.f32 %v1426
    %v1443 = vcvt.s32.f32 %v1427
    %v1444 = vcvt.s32.f32 %v1428
    %v1445 = vcvt.s32.f32 %v1429
    %v1446 = vcvt.s32.f32 %v1430
    %v1447 = vcvt.s32.f32 %v1431
    %v1448 = vcvt.s32.f32 %v1432
    %v1449 = vcvt.s32.f32 %v1433
    %v1450 = vcvt.s32.f32 %v1434
    %v1451 = vcvt.s32.f32 %v1435
    %v1452 = vcvt.s32.f32 %v1436
    %v1453 = vcvt.s32.f32 %v1437
    %v1454 = vcvt.s32.f32 %v1438
    %v1455 = vcvt.s32.f32 %v1439
    %v1456 = vcvt.s32.f32 %v1440
    %v1457 = vcvt.s32.f32 %v1441
    %v1458 = vsub.f32 0.5, %v1297
    %v1459 = vsub.f32 0.5, %v1300
    %v1460 = vsub.f32 0.5, %v1303
    %v1461 = vsub.f32 0.5, %v1306
    %v1462 = vsub.f32 0.5, %v1309
    %v1463 = vsub.f32 0.5, %v1312
    %v1464 = vsub.f32 0.5, %v1315
    %v1465 = vsub.f32 0.5, %v1318
    %v1466 = vsub.f32 0.5, %v1321
    %v1467 = vsub.f32 0.5, %v1324
    %v1468 = vsub.f32 0.5, %v1327
    %v1469 = vsub.f32 0.5, %v1330
    %v1470 = vsub.f32 0.5, %v1333
    %v1471 = vsub.f32 0.5, %v1336
    %v1472 = vsub.f32 0.5, %v1339
    %v1473 = vsub.f32 0.5, %v1342
    %v1474 = vmax.f32 %v1458, 0.0
    %v1475 = vmax.f32 %v1459, 0.0
    %v1476 = vmax.f32 %v1460, 0.0
    %v1477 = vmax.f32 %v1461, 0.0
    %v1478 = vmax.f32 %v1462, 0.0
    %v1479 = vmax.f32 %v1463, 0.0
    %v1480 = vmax.f32 %v1464, 0.0
    %v1481 = vmax.f32 %v1465, 0.0
    %v1482 = vmax.f32 %v1466, 0.0
    %v1483 = vmax.f32 %v1467, 0.0
    %v1484 = vmax.f32 %v1468, 0.0
    %v1485 = vmax.f32 %v1469, 0.0
    %v1486 = vmax.f32 %v1470, 0.0
    %v1487 = vmax.f32 %v1471, 0.0
    %v1488 = vmax.f32 %v1472, 0.0
    %v1489 = vmax.f32 %v1473, 0.0
    %v1490 = vmul.f32 %v1474, %v1474
    %v1491 = vmul.f32 %v1475, %v1475
    %v1492 = vmul.f32 %v1476, %v1476
    %v1493 = vmul.f32 %v1477, %v1477
    %v1494 = vmul.f32 %v1478, %v1478
    %v1495 = vmul.f32 %v1479, %v1479
    %v1496 = vmul.f32 %v1480, %v1480
    %v1497 = vmul.f32 %v1481, %v1481
    %v1498 = vmul.f32 %v1482, %v1482
    %v1499 = vmul.f32 %v1483, %v1483
    %v1500 = vmul.f32 %v1484, %v1484
    %v1501 = vmul.f32 %v1485, %v1485
    %v1502 = vmul.f32 %v1486, %v1486
    %v1503 = vmul.f32 %v1487, %v1487
    %v1504 = vmul.f32 %v1488, %v1488
    %v1505 = vmul.f32 %v1489, %v1489
    %v1506 = vsub.f32 1.0, %v1442
    %v1507 = vsub.f32 1.0, %v1443
    %v1508 = vsub.f32 1.0, %v1444
    %v1509 = vsub.f32 1.0, %v1445
    %v1510 = vsub.f32 1.0, %v1446
    %v1511 = vsub.f32 1.0, %v1447
    %v1512 = vsub.f32 1.0, %v1448
    %v1513 = vsub.f32 1.0, %v1449
    %v1514 = vsub.f32 1.0, %v1450
    %v1515 = vsub.f32 1.0, %v1451
    %v1516 = vsub.f32 1.0, %v1452
    %v1517 = vsub.f32 1.0, %v1453
    %v1518 = vsub.f32 1.0, %v1454
    %v1519 = vsub.f32 1.0, %v1455
    %v1520 = vsub.f32 1.0, %v1456
    %v1521 = vsub.f32 1.0, %v1457
    %v1522 = vmul.f32 %v1506, 1e+30
    %v1523 = vmul.f32 %v1507, 1e+30
    %v1524 = vmul.f32 %v1508, 1e+30
    %v1525 = vmul.f32 %v1509, 1e+30
    %v1526 = vmul.f32 %v1510, 1e+30
    %v1527 = vmul.f32 %v1511, 1e+30
    %v1528 = vmul.f32 %v1512, 1e+30
    %v1529 = vmul.f32 %v1513, 1e+30
    %v1530 = vmul.f32 %v1514, 1e+30
    %v1531 = vmul.f32 %v1515, 1e+30
    %v1532 = vmul.f32 %v1516, 1e+30
    %v1533 = vmul.f32 %v1517, 1e+30
    %v1534 = vmul.f32 %v1518, 1e+30
    %v1535 = vmul.f32 %v1519, 1e+30
    %v1536 = vmul.f32 %v1520, 1e+30
    %v1537 = vmul.f32 %v1521, 1e+30
    %v1538 = vsub.f32 %v1490, %v1522
    %v1539 = vsub.f32 %v1491, %v1523
    %v1540 = vsub.f32 %v1492, %v1524
    %v1541 = vsub.f32 %v1493, %v1525
    %v1542 = vsub.f32 %v1494, %v1526
    %v1543 = vsub.f32 %v1495, %v1527
    %v1544 = vsub.f32 %v1496, %v1528
    %v1545 = vsub.f32 %v1497, %v1529
    %v1546 = vsub.f32 %v1498, %v1530
    %v1547 = vsub.f32 %v1499, %v1531
    %v1548 = vsub.f32 %v1500, %v1532
    %v1549 = vsub.f32 %v1501, %v1533
    %v1550 = vsub.f32 %v1502, %v1534
    %v1551 = vsub.f32 %v1503, %v1535
    %v1552 = vsub.f32 %v1504, %v1536
    %v1553 = vsub.f32 %v1505, %v1537
    %v1554 = vmax.f32 %v1297, 0.0
    %v1555 = vmax.f32 %v1300, 0.0
    %v1556 = vmax.f32 %v1303, 0.0
    %v1557 = vmax.f32 %v1306, 0.0
    %v1558 = vmax.f32 %v1309, 0.0
    %v1559 = vmax.f32 %v1312, 0.0
    %v1560 = vmax.f32 %v1315, 0.0
    %v1561 = vmax.f32 %v1318, 0.0
    %v1562 = vmax.f32 %v1321, 0.0
    %v1563 = vmax.f32 %v1324, 0.0
    %v1564 = vmax.f32 %v1327, 0.0
    %v1565 = vmax.f32 %v1330, 0.0
    %v1566 = vmax.f32 %v1333, 0.0
    %v1567 = vmax.f32 %v1336, 0.0
    %v1568 = vmax.f32 %v1339, 0.0
    %v1569 = vmax.f32 %v1342, 0.0
    %v1570 = vmul.f32 %v1554, %v1554
    %v1571 = vmul.f32 %v1555, %v1555
    %v1572 = vmul.f32 %v1556, %v1556
    %v1573 = vmul.f32 %v1557, %v1557
    %v1574 = vmul.f32 %v1558, %v1558
    %v1575 = vmul.f32 %v1559, %v1559
    %v1576 = vmul.f32 %v1560, %v1560
    %v1577 = vmul.f32 %v1561, %v1561
    %v1578 = vmul.f32 %v1562, %v1562
    %v1579 = vmul.f32 %v1563, %v1563
    %v1580 = vmul.f32 %v1564, %v1564
    %v1581 = vmul.f32 %v1565, %v1565
    %v1582 = vmul.f32 %v1566, %v1566
    %v1583 = vmul.f32 %v1567, %v1567
    %v1584 = vmul.f32 %v1568, %v1568
    %v1585 = vmul.f32 %v1569, %v1569
    %v1586 = vmul.f32 %v1442, 1e+30
    %v1587 = vmul.f32 %v1443, 1e+30
    %v1588 = vmul.f32 %v1444, 1e+30
    %v1589 = vmul.f32 %v1445, 1e+30
    %v1590 = vmul.f32 %v1446, 1e+30
    %v1591 = vmul.f32 %v1447, 1e+30
    %v1592 = vmul.f32 %v1448, 1e+30
    %v1593 = vmul.f32 %v1449, 1e+30
    %v1594 = vmul.f32 %v1450, 1e+30
    %v1595 = vmul.f32 %v1451, 1e+30
    %v1596 = vmul.f32 %v1452, 1e+30
    %v1597 = vmul.f32 %v1453, 1e+30
    %v1598 = vmul.f32 %v1454, 1e+30
    %v1599 = vmul.f32 %v1455, 1e+30
    %v1600 = vmul.f32 %v1456, 1e+30
    %v1601 = vmul.f32 %v1457, 1e+30
    %v1602 = vsub.f32 %v1570, %v1586
    %v1603 = vsub.f32 %v1571, %v1587
    %v1604 = vsub.f32 %v1572, %v1588
    %v1605 = vsub.f32 %v1573, %v1589
    %v1606 = vsub.f32 %v1574, %v1590
    %v1607 = vsub.f32 %v1575, %v1591
    %v1608 = vsub.f32 %v1576, %v1592
    %v1609 = vsub.f32 %v1577, %v1593
    %v1610 = vsub.f32 %v1578, %v1594
    %v1611 = vsub.f32 %v1579, %v1595
    %v1612 = vsub.f32 %v1580, %v1596
    %v1613 = vsub.f32 %v1581, %v1597
    %v1614 = vsub.f32 %v1582, %v1598
    %v1615 = vsub.f32 %v1583, %v1599
    %v1616 = vsub.f32 %v1584, %v1600
    %v1617 = vsub.f32 %v1585, %v1601
    %v1618 = vlaneseq
    %v1619 = vand.u32 %v1618, 127
    %s1620 = smul.u32 0, 128
    %v1621 = vstv %s1620
    %v1622 = vadd.s32 %v1619, %v1621
    %vm1623 = vcmp.lt.s32.totalorder %v1622, 8
    %v1624 = vsel %vm1623, %v1538, -inf
    %v1625 = vsel %vm1623, %v1539, -inf
    %v1626 = vsel %vm1623, %v1540, -inf
    %v1627 = vsel %vm1623, %v1541, -inf
    %v1628 = vsel %vm1623, %v1542, -inf
    %v1629 = vsel %vm1623, %v1543, -inf
    %v1630 = vsel %vm1623, %v1544, -inf
    %v1631 = vsel %vm1623, %v1545, -inf
    %v1632 = vsel %vm1623, %v1546, -inf
    %v1633 = vsel %vm1623, %v1547, -inf
    %v1634 = vsel %vm1623, %v1548, -inf
    %v1635 = vsel %vm1623, %v1549, -inf
    %v1636 = vsel %vm1623, %v1550, -inf
    %v1637 = vsel %vm1623, %v1551, -inf
    %v1638 = vsel %vm1623, %v1552, -inf
    %v1639 = vsel %vm1623, %v1553, -inf
    %v1640 = vsel %vm1623, %v1602, -inf
    %v1641 = vsel %vm1623, %v1603, -inf
    %v1642 = vsel %vm1623, %v1604, -inf
    %v1643 = vsel %vm1623, %v1605, -inf
    %v1644 = vsel %vm1623, %v1606, -inf
    %v1645 = vsel %vm1623, %v1607, -inf
    %v1646 = vsel %vm1623, %v1608, -inf
    %v1647 = vsel %vm1623, %v1609, -inf
    %v1648 = vsel %vm1623, %v1610, -inf
    %v1649 = vsel %vm1623, %v1611, -inf
    %v1650 = vsel %vm1623, %v1612, -inf
    %v1651 = vsel %vm1623, %v1613, -inf
    %v1652 = vsel %vm1623, %v1614, -inf
    %v1653 = vsel %vm1623, %v1615, -inf
    %v1654 = vsel %vm1623, %v1616, -inf
    %v1655 = vsel %vm1623, %v1617, -inf
    %v1656 = vld [vmem:[#allocation2] sm:$0xff]
    %v1657 = vld [vmem:[#allocation2 + $0x8] sm:$0xff]
    %v1658 = vld [vmem:[#allocation2 + $0x10] sm:$0xff]
    %v1659 = vld [vmem:[#allocation2 + $0x18] sm:$0xff]
    %v1660 = vld [vmem:[#allocation2 + $0x20] sm:$0xff]
    %v1661 = vld [vmem:[#allocation2 + $0x28] sm:$0xff]
    %v1662 = vld [vmem:[#allocation2 + $0x30] sm:$0xff]
    %v1663 = vld [vmem:[#allocation2 + $0x38] sm:$0xff]
    %v1664 = vld [vmem:[#allocation2 + $0x40] sm:$0xff]
    %v1665 = vld [vmem:[#allocation2 + $0x48] sm:$0xff]
    %v1666 = vld [vmem:[#allocation2 + $0x50] sm:$0xff]
    %v1667 = vld [vmem:[#allocation2 + $0x58] sm:$0xff]
    %v1668 = vld [vmem:[#allocation2 + $0x60] sm:$0xff]
    %v1669 = vld [vmem:[#allocation2 + $0x68] sm:$0xff]
    %v1670 = vld [vmem:[#allocation2 + $0x70] sm:$0xff]
    %v1671 = vld [vmem:[#allocation2 + $0x78] sm:$0xff]
    %1672 = vmax.xlane.f32.xlu0 %v1624
    %v1673 = vpop.xlane.xlu0 %1672
    %1674 = vmax.xlane.f32.xlu0 %v1625
    %v1675 = vpop.xlane.xlu0 %1674
    %1676 = vmax.xlane.f32.xlu0 %v1626
    %v1677 = vpop.xlane.xlu0 %1676
    %1678 = vmax.xlane.f32.xlu0 %v1627
    %v1679 = vpop.xlane.xlu0 %1678
    %1680 = vmax.xlane.f32.xlu0 %v1628
    %v1681 = vpop.xlane.xlu0 %1680
    %1682 = vmax.xlane.f32.xlu0 %v1629
    %v1683 = vpop.xlane.xlu0 %1682
    %1684 = vmax.xlane.f32.xlu0 %v1630
    %v1685 = vpop.xlane.xlu0 %1684
    %1686 = vmax.xlane.f32.xlu0 %v1631
    %v1687 = vpop.xlane.xlu0 %1686
    %1688 = vmax.xlane.f32.xlu0 %v1632
    %v1689 = vpop.xlane.xlu0 %1688
    %1690 = vmax.xlane.f32.xlu0 %v1633
    %v1691 = vpop.xlane.xlu0 %1690
    %1692 = vmax.xlane.f32.xlu0 %v1634
    %v1693 = vpop.xlane.xlu0 %1692
    %1694 = vmax.xlane.f32.xlu0 %v1635
    %v1695 = vpop.xlane.xlu0 %1694
    %1696 = vmax.xlane.f32.xlu0 %v1636
    %v1697 = vpop.xlane.xlu0 %1696
    %1698 = vmax.xlane.f32.xlu0 %v1637
    %v1699 = vpop.xlane.xlu0 %1698
    %1700 = vmax.xlane.f32.xlu0 %v1638
    %v1701 = vpop.xlane.xlu0 %1700
    %1702 = vmax.xlane.f32.xlu0 %v1639
    %v1703 = vpop.xlane.xlu0 %1702
    %v1704 = vmax.f32 %v1656, %v1673
    %v1705 = vmax.f32 %v1657, %v1675
    %v1706 = vmax.f32 %v1658, %v1677
    %v1707 = vmax.f32 %v1659, %v1679
    %v1708 = vmax.f32 %v1660, %v1681
    %v1709 = vmax.f32 %v1661, %v1683
    %v1710 = vmax.f32 %v1662, %v1685
    %v1711 = vmax.f32 %v1663, %v1687
    %v1712 = vmax.f32 %v1664, %v1689
    %v1713 = vmax.f32 %v1665, %v1691
    %v1714 = vmax.f32 %v1666, %v1693
    %v1715 = vmax.f32 %v1667, %v1695
    %v1716 = vmax.f32 %v1668, %v1697
    %v1717 = vmax.f32 %v1669, %v1699
    %v1718 = vmax.f32 %v1670, %v1701
    %v1719 = vmax.f32 %v1671, %v1703
    %vm1720 = vcmask 7168
    %1721 = vst.msk [vmem:[#allocation2] sm:$0xff] %vm1720, %v1704
    %1722 = vst.msk [vmem:[#allocation2 + $0x8] sm:$0xff] %vm1720, %v1705
    %1723 = vst.msk [vmem:[#allocation2 + $0x10] sm:$0xff] %vm1720, %v1706
    %1724 = vst.msk [vmem:[#allocation2 + $0x18] sm:$0xff] %vm1720, %v1707
    %1725 = vst.msk [vmem:[#allocation2 + $0x20] sm:$0xff] %vm1720, %v1708
    %1726 = vst.msk [vmem:[#allocation2 + $0x28] sm:$0xff] %vm1720, %v1709
    %1727 = vst.msk [vmem:[#allocation2 + $0x30] sm:$0xff] %vm1720, %v1710
    %1728 = vst.msk [vmem:[#allocation2 + $0x38] sm:$0xff] %vm1720, %v1711
    %1729 = vst.msk [vmem:[#allocation2 + $0x40] sm:$0xff] %vm1720, %v1712
    %1730 = vst.msk [vmem:[#allocation2 + $0x48] sm:$0xff] %vm1720, %v1713
    %1731 = vst.msk [vmem:[#allocation2 + $0x50] sm:$0xff] %vm1720, %v1714
    %1732 = vst.msk [vmem:[#allocation2 + $0x58] sm:$0xff] %vm1720, %v1715
    %1733 = vst.msk [vmem:[#allocation2 + $0x60] sm:$0xff] %vm1720, %v1716
    %1734 = vst.msk [vmem:[#allocation2 + $0x68] sm:$0xff] %vm1720, %v1717
    %1735 = vst.msk [vmem:[#allocation2 + $0x70] sm:$0xff] %vm1720, %v1718
    %1736 = vst.msk [vmem:[#allocation2 + $0x78] sm:$0xff] %vm1720, %v1719
    %v1737 = vld [vmem:[#allocation3] sm:$0xff]
    %v1738 = vld [vmem:[#allocation3 + $0x8] sm:$0xff]
    %v1739 = vld [vmem:[#allocation3 + $0x10] sm:$0xff]
    %v1740 = vld [vmem:[#allocation3 + $0x18] sm:$0xff]
    %v1741 = vld [vmem:[#allocation3 + $0x20] sm:$0xff]
    %v1742 = vld [vmem:[#allocation3 + $0x28] sm:$0xff]
    %v1743 = vld [vmem:[#allocation3 + $0x30] sm:$0xff]
    %v1744 = vld [vmem:[#allocation3 + $0x38] sm:$0xff]
    %v1745 = vld [vmem:[#allocation3 + $0x40] sm:$0xff]
    %v1746 = vld [vmem:[#allocation3 + $0x48] sm:$0xff]
    %v1747 = vld [vmem:[#allocation3 + $0x50] sm:$0xff]
    %v1748 = vld [vmem:[#allocation3 + $0x58] sm:$0xff]
    %v1749 = vld [vmem:[#allocation3 + $0x60] sm:$0xff]
    %v1750 = vld [vmem:[#allocation3 + $0x68] sm:$0xff]
    %v1751 = vld [vmem:[#allocation3 + $0x70] sm:$0xff]
    %v1752 = vld [vmem:[#allocation3 + $0x78] sm:$0xff]
    %1753 = vmax.xlane.f32.xlu0 %v1640
    %v1754 = vpop.xlane.xlu0 %1753
    %1755 = vmax.xlane.f32.xlu0 %v1641
    %v1756 = vpop.xlane.xlu0 %1755
    %1757 = vmax.xlane.f32.xlu0 %v1642
    %v1758 = vpop.xlane.xlu0 %1757
    %1759 = vmax.xlane.f32.xlu0 %v1643
    %v1760 = vpop.xlane.xlu0 %1759
    %1761 = vmax.xlane.f32.xlu0 %v1644
    %v1762 = vpop.xlane.xlu0 %1761
    %1763 = vmax.xlane.f32.xlu0 %v1645
    %v1764 = vpop.xlane.xlu0 %1763
    %1765 = vmax.xlane.f32.xlu0 %v1646
    %v1766 = vpop.xlane.xlu0 %1765
    %1767 = vmax.xlane.f32.xlu0 %v1647
    %v1768 = vpop.xlane.xlu0 %1767
    %1769 = vmax.xlane.f32.xlu0 %v1648
    %v1770 = vpop.xlane.xlu0 %1769
    %1771 = vmax.xlane.f32.xlu0 %v1649
    %v1772 = vpop.xlane.xlu0 %1771
    %1773 = vmax.xlane.f32.xlu0 %v1650
    %v1774 = vpop.xlane.xlu0 %1773
    %1775 = vmax.xlane.f32.xlu0 %v1651
    %v1776 = vpop.xlane.xlu0 %1775
    %1777 = vmax.xlane.f32.xlu0 %v1652
    %v1778 = vpop.xlane.xlu0 %1777
    %1779 = vmax.xlane.f32.xlu0 %v1653
    %v1780 = vpop.xlane.xlu0 %1779
    %1781 = vmax.xlane.f32.xlu0 %v1654
    %v1782 = vpop.xlane.xlu0 %1781
    %1783 = vmax.xlane.f32.xlu0 %v1655
    %v1784 = vpop.xlane.xlu0 %1783
    %v1785 = vmax.f32 %v1737, %v1754
    %v1786 = vmax.f32 %v1738, %v1756
    %v1787 = vmax.f32 %v1739, %v1758
    %v1788 = vmax.f32 %v1740, %v1760
    %v1789 = vmax.f32 %v1741, %v1762
    %v1790 = vmax.f32 %v1742, %v1764
    %v1791 = vmax.f32 %v1743, %v1766
    %v1792 = vmax.f32 %v1744, %v1768
    %v1793 = vmax.f32 %v1745, %v1770
    %v1794 = vmax.f32 %v1746, %v1772
    %v1795 = vmax.f32 %v1747, %v1774
    %v1796 = vmax.f32 %v1748, %v1776
    %v1797 = vmax.f32 %v1749, %v1778
    %v1798 = vmax.f32 %v1750, %v1780
    %v1799 = vmax.f32 %v1751, %v1782
    %v1800 = vmax.f32 %v1752, %v1784
    %1801 = vst.msk [vmem:[#allocation3] sm:$0xff] %vm1720, %v1785
    %1802 = vst.msk [vmem:[#allocation3 + $0x8] sm:$0xff] %vm1720, %v1786
    %1803 = vst.msk [vmem:[#allocation3 + $0x10] sm:$0xff] %vm1720, %v1787
    %1804 = vst.msk [vmem:[#allocation3 + $0x18] sm:$0xff] %vm1720, %v1788
    %1805 = vst.msk [vmem:[#allocation3 + $0x20] sm:$0xff] %vm1720, %v1789
    %1806 = vst.msk [vmem:[#allocation3 + $0x28] sm:$0xff] %vm1720, %v1790
    %1807 = vst.msk [vmem:[#allocation3 + $0x30] sm:$0xff] %vm1720, %v1791
    %1808 = vst.msk [vmem:[#allocation3 + $0x38] sm:$0xff] %vm1720, %v1792
    %1809 = vst.msk [vmem:[#allocation3 + $0x40] sm:$0xff] %vm1720, %v1793
    %1810 = vst.msk [vmem:[#allocation3 + $0x48] sm:$0xff] %vm1720, %v1794
    %1811 = vst.msk [vmem:[#allocation3 + $0x50] sm:$0xff] %vm1720, %v1795
    %1812 = vst.msk [vmem:[#allocation3 + $0x58] sm:$0xff] %vm1720, %v1796
    %1813 = vst.msk [vmem:[#allocation3 + $0x60] sm:$0xff] %vm1720, %v1797
    %1814 = vst.msk [vmem:[#allocation3 + $0x68] sm:$0xff] %vm1720, %v1798
    %1815 = vst.msk [vmem:[#allocation3 + $0x70] sm:$0xff] %vm1720, %v1799
    %1816 = vst.msk [vmem:[#allocation3 + $0x78] sm:$0xff] %vm1720, %v1800
    // Predicated region
    $region26: #{tpu_custom_call.1} parent=1 // pred_check
      %p1817 = pneg %p19
    $region27: #{tpu_custom_call.1} parent=1 // pred_check_branch
      %1819 = sbr.rel (%p1817) target = $region29
    $region28: #{tpu_custom_call.1} parent=1 // pred_region
      %v1820 = vlaneseq
      %v1821 = vshrl.u32 %v1820, 7
      %v1822 = vadd.s32 %v1821, 8
      %v1823 = vadd.s32 %v1821, 16
      %v1824 = vadd.s32 %v1821, 24
      %v1825 = vadd.s32 %v1821, 32
      %v1826 = vadd.s32 %v1821, 40
      %v1827 = vadd.s32 %v1821, 48
      %v1828 = vadd.s32 %v1821, 56
      %v1829 = vadd.s32 %v1821, 64
      %v1830 = vadd.s32 %v1821, 72
      %v1831 = vadd.s32 %v1821, 80
      %v1832 = vadd.s32 %v1821, 88
      %v1833 = vadd.s32 %v1821, 96
      %v1834 = vadd.s32 %v1821, 104
      %v1835 = vadd.s32 %v1821, 112
      %v1836 = vadd.s32 %v1821, 120
      %s1837 = smul.u32 0, 128
      %v1838 = vstv %s1837
      %v1839 = vadd.s32 %v1821, %v1838
      %v1840 = vadd.s32 %v1822, %v1838
      %v1841 = vadd.s32 %v1823, %v1838
      %v1842 = vadd.s32 %v1824, %v1838
      %v1843 = vadd.s32 %v1825, %v1838
      %v1844 = vadd.s32 %v1826, %v1838
      %v1845 = vadd.s32 %v1827, %v1838
      %v1846 = vadd.s32 %v1828, %v1838
      %v1847 = vadd.s32 %v1829, %v1838
      %v1848 = vadd.s32 %v1830, %v1838
      %v1849 = vadd.s32 %v1831, %v1838
      %v1850 = vadd.s32 %v1832, %v1838
      %v1851 = vadd.s32 %v1833, %v1838
      %v1852 = vadd.s32 %v1834, %v1838
      %v1853 = vadd.s32 %v1835, %v1838
      %v1854 = vadd.s32 %v1836, %v1838
      %vm1855 = vcmp.lt.s32.totalorder %v1839, 8
      %vm1856 = vcmp.lt.s32.totalorder %v1840, 8
      %vm1857 = vcmp.lt.s32.totalorder %v1841, 8
      %vm1858 = vcmp.lt.s32.totalorder %v1842, 8
      %vm1859 = vcmp.lt.s32.totalorder %v1843, 8
      %vm1860 = vcmp.lt.s32.totalorder %v1844, 8
      %vm1861 = vcmp.lt.s32.totalorder %v1845, 8
      %vm1862 = vcmp.lt.s32.totalorder %v1846, 8
      %vm1863 = vcmp.lt.s32.totalorder %v1847, 8
      %vm1864 = vcmp.lt.s32.totalorder %v1848, 8
      %vm1865 = vcmp.lt.s32.totalorder %v1849, 8
      %vm1866 = vcmp.lt.s32.totalorder %v1850, 8
      %vm1867 = vcmp.lt.s32.totalorder %v1851, 8
      %vm1868 = vcmp.lt.s32.totalorder %v1852, 8
      %vm1869 = vcmp.lt.s32.totalorder %v1853, 8
      %vm1870 = vcmp.lt.s32.totalorder %v1854, 8
      %v1871 = vld [vmem:[#allocation2] sm:$0xff]
      %v1872 = vld [vmem:[#allocation2 + $0x8] sm:$0xff]
      %v1873 = vld [vmem:[#allocation2 + $0x10] sm:$0xff]
      %v1874 = vld [vmem:[#allocation2 + $0x18] sm:$0xff]
      %v1875 = vld [vmem:[#allocation2 + $0x20] sm:$0xff]
      %v1876 = vld [vmem:[#allocation2 + $0x28] sm:$0xff]
      %v1877 = vld [vmem:[#allocation2 + $0x30] sm:$0xff]
      %v1878 = vld [vmem:[#allocation2 + $0x38] sm:$0xff]
      %v1879 = vld [vmem:[#allocation2 + $0x40] sm:$0xff]
      %v1880 = vld [vmem:[#allocation2 + $0x48] sm:$0xff]
      %v1881 = vld [vmem:[#allocation2 + $0x50] sm:$0xff]
      %v1882 = vld [vmem:[#allocation2 + $0x58] sm:$0xff]
      %v1883 = vld [vmem:[#allocation2 + $0x60] sm:$0xff]
      %v1884 = vld [vmem:[#allocation2 + $0x68] sm:$0xff]
      %v1885 = vld [vmem:[#allocation2 + $0x70] sm:$0xff]
      %v1886 = vld [vmem:[#allocation2 + $0x78] sm:$0xff]
      %v1887 = vld [vmem:[#allocation3] sm:$0xff]
      %v1888 = vld [vmem:[#allocation3 + $0x8] sm:$0xff]
      %v1889 = vld [vmem:[#allocation3 + $0x10] sm:$0xff]
      %v1890 = vld [vmem:[#allocation3 + $0x18] sm:$0xff]
      %v1891 = vld [vmem:[#allocation3 + $0x20] sm:$0xff]
      %v1892 = vld [vmem:[#allocation3 + $0x28] sm:$0xff]
      %v1893 = vld [vmem:[#allocation3 + $0x30] sm:$0xff]
      %v1894 = vld [vmem:[#allocation3 + $0x38] sm:$0xff]
      %v1895 = vld [vmem:[#allocation3 + $0x40] sm:$0xff]
      %v1896 = vld [vmem:[#allocation3 + $0x48] sm:$0xff]
      %v1897 = vld [vmem:[#allocation3 + $0x50] sm:$0xff]
      %v1898 = vld [vmem:[#allocation3 + $0x58] sm:$0xff]
      %v1899 = vld [vmem:[#allocation3 + $0x60] sm:$0xff]
      %v1900 = vld [vmem:[#allocation3 + $0x68] sm:$0xff]
      %v1901 = vld [vmem:[#allocation3 + $0x70] sm:$0xff]
      %v1902 = vld [vmem:[#allocation3 + $0x78] sm:$0xff]
      %v1903 = vadd.f32 %v1871, %v1887
      %v1904 = vadd.f32 %v1872, %v1888
      %v1905 = vadd.f32 %v1873, %v1889
      %v1906 = vadd.f32 %v1874, %v1890
      %v1907 = vadd.f32 %v1875, %v1891
      %v1908 = vadd.f32 %v1876, %v1892
      %v1909 = vadd.f32 %v1877, %v1893
      %v1910 = vadd.f32 %v1878, %v1894
      %v1911 = vadd.f32 %v1879, %v1895
      %v1912 = vadd.f32 %v1880, %v1896
      %v1913 = vadd.f32 %v1881, %v1897
      %v1914 = vadd.f32 %v1882, %v1898
      %v1915 = vadd.f32 %v1883, %v1899
      %v1916 = vadd.f32 %v1884, %v1900
      %v1917 = vadd.f32 %v1885, %v1901
      %v1918 = vadd.f32 %v1886, %v1902
      %v1919 = vsel %vm1855, %v1903, 0.0
      %v1920 = vsel %vm1856, %v1904, 0.0
      %v1921 = vsel %vm1857, %v1905, 0.0
      %v1922 = vsel %vm1858, %v1906, 0.0
      %v1923 = vsel %vm1859, %v1907, 0.0
      %v1924 = vsel %vm1860, %v1908, 0.0
      %v1925 = vsel %vm1861, %v1909, 0.0
      %v1926 = vsel %vm1862, %v1910, 0.0
      %v1927 = vsel %vm1863, %v1911, 0.0
      %v1928 = vsel %vm1864, %v1912, 0.0
      %v1929 = vsel %vm1865, %v1913, 0.0
      %v1930 = vsel %vm1866, %v1914, 0.0
      %v1931 = vsel %vm1867, %v1915, 0.0
      %v1932 = vsel %vm1868, %v1916, 0.0
      %v1933 = vsel %vm1869, %v1917, 0.0
      %v1934 = vsel %vm1870, %v1918, 0.0
      %s1935 = sld [smem:[#allocation4]]
      %v1936 = vsel %vm1720, %v1919, 0.0
      %v1937 = vsel %vm1720, %v1920, 0.0
      %v1938 = vadd.f32 %v1936, %v1937
      %v1939 = vsel %vm1720, %v1921, 0.0
      %v1940 = vadd.f32 %v1938, %v1939
      %v1941 = vsel %vm1720, %v1922, 0.0
      %v1942 = vadd.f32 %v1940, %v1941
      %v1943 = vsel %vm1720, %v1923, 0.0
      %v1944 = vadd.f32 %v1942, %v1943
      %v1945 = vsel %vm1720, %v1924, 0.0
      %v1946 = vadd.f32 %v1944, %v1945
      %v1947 = vsel %vm1720, %v1925, 0.0
      %v1948 = vadd.f32 %v1946, %v1947
      %v1949 = vsel %vm1720, %v1926, 0.0
      %v1950 = vadd.f32 %v1948, %v1949
      %v1951 = vsel %vm1720, %v1927, 0.0
      %v1952 = vadd.f32 %v1950, %v1951
      %v1953 = vsel %vm1720, %v1928, 0.0
      %v1954 = vadd.f32 %v1952, %v1953
      %v1955 = vsel %vm1720, %v1929, 0.0
      %v1956 = vadd.f32 %v1954, %v1955
      %v1957 = vsel %vm1720, %v1930, 0.0
      %v1958 = vadd.f32 %v1956, %v1957
      %v1959 = vsel %vm1720, %v1931, 0.0
      %v1960 = vadd.f32 %v1958, %v1959
      %v1961 = vsel %vm1720, %v1932, 0.0
      %v1962 = vadd.f32 %v1960, %v1961
      %v1963 = vsel %vm1720, %v1933, 0.0
      %v1964 = vadd.f32 %v1962, %v1963
      %v1965 = vsel %vm1720, %v1934, 0.0
      %v1966 = vadd.f32 %v1964, %v1965
      %1967 = vadd.xlane.f32.xlu0 %v1966
      %v1968 = vpop.xlane.xlu0 %1967
      %v1969 = vrot.slane %v1968, 4
      %v1970 = vadd.f32 %v1968, %v1969
      %v1971 = vrot.slane %v1970, 2
      %v1972 = vadd.f32 %v1970, %v1971
      %v1973 = vrot.slane %v1972, 1
      %v1974 = vadd.f32 %v1972, %v1973
      %s1975 = vtos %v1974
      %s1976 = sadd.f32 %s1935, %s1975
      %s1977 = scalar_lea.smem [#allocation4], 0
      %1978 = sst [smem:[%s1977]] %s1976
    $region29: #{tpu_custom_call.1} parent=1 // pred_fallthru
      _
    // Predicated region
    $region30: #{tpu_custom_call.1} parent=1 // pred_check
      _
    $region31: #{tpu_custom_call.1} parent=1 // pred_check_branch
      %1980 = sbr.rel (%p20) target = $region33
    $region32: #{tpu_custom_call.1} parent=1 // pred_region
      %s1981 = sld [smem:[#allocation4]]
      %v1982 = vstv %s1981
      %1983 = vst [vmem:[#allocation5] sm:$0xff] %v1982
    $region33: #{tpu_custom_call.1} parent=1 // pred_fallthru
      _
    // Predicated region
    $region34: #{tpu_custom_call.1} parent=1 // pred_check
      _
    $region35: #{tpu_custom_call.1} parent=1 // pred_check_branch
      %1985 = sbr.rel (0) target = $region37
    $region36: #{tpu_custom_call.1} parent=1 // pred_region
      %1987 = vsyncadd [#allocation6], 0
      %s1989 = sshll.u32 [#allocation5], 4
      %s1990 = int_to_ptr.vmem [resolvable:$true] %s1989
      %s1991 = sshll.u32 %s4, 4
      %s1992 = int_to_ptr.hbm [resolvable:$true] %s1991
      %1994 = dma.vmem_to_hbm [thread:$0]  %s1990, 128, %s1992, [#allocation6]
    $region37: #{tpu_custom_call.1} parent=1 // pred_fallthru
      _
    // Predicated region
    $region38: #{tpu_custom_call.1} parent=1 // pred_check
      _
    $region39: #{tpu_custom_call.1} parent=1 // pred_check_branch
      %1996 = sbr.rel (0) target = $region41
    $region40: #{tpu_custom_call.1} parent=1 // pred_region
      %1998 = dma.done [#allocation6], 128
    $region41: #{tpu_custom_call.1} parent=1 // pred_fallthru
      _
    %1999 = vsyncpa [#allocation6], 1

</llo_original>
